<compile_context>
chip_gen: v7x
topology: tpu7x:2x2x1
jax: 0.10.0
libtpu: 0.0.40
codegen_flags: <defaults>
</compile_context>

<pallas_src>
import functools

import jax
import jax.numpy as jnp
from jax.experimental import pallas as pl
from jax.experimental.pallas import tpu as pltpu

LEAKY_SLOPE = 0.01   # nn.LeakyReLU default
LANE = 128           # TPU lane width


def _round_up(n, m):
    return ((n + m - 1) // m) * m


# ----------------------------------------------------------------------------
# Kernel
# ----------------------------------------------------------------------------
def _vae_kernel(*refs, n_hidden, latent_dim, latent_pad, input_size, input_pad):
    """All refs are VMEM tiles.

    ref order:
      x   (TB, input_pad)  bf16  (lane-padded, zero pad cols)
      eps (TB, latent_pad) bf16  (lane-padded, zero pad cols)
      encoder params: [W0, b0, ..., W_{n-1}, b_{n-1}, W_head, b_head]  (head = mean||log_var, halves 128-aligned)
      decoder params: same layout
      outputs: re_ref (TB, 1) f32, kl_ref (TB, 1) f32
    Weights are bf16 (in_pad, out_pad); biases are f32 (1, out_pad).
    """
    n_params_each = 2 * (n_hidden + 1)
    x_ref, eps_ref = refs[0], refs[1]
    enc = refs[2:2 + n_params_each]
    dec = refs[2 + n_params_each:2 + 2 * n_params_each]
    re_ref, kl_ref = refs[-2], refs[-1]

    x_bf = x_ref[...]                         # bf16, goes straight into the first matmul
    x_f32 = x_bf.astype(jnp.float32)          # f32 copy only for the diff epilogue

    def mlp_head(h_bf, params, split):
        # hidden stack: bf16 matmul (f32 accumulate), f32 bias + LeakyReLU, cast back to bf16
        h = h_bf
        for l in range(n_hidden):
            w = params[2 * l][...]            # bf16 (in_pad, out_pad)
            b = params[2 * l + 1][...]        # f32  (1, out_pad)
            a = jnp.dot(h, w, preferred_element_type=jnp.float32) + b
            a = jnp.maximum(a, LEAKY_SLOPE * a)            # LeakyReLU
            h = a.astype(jnp.bfloat16)
        w_head = params[2 * n_hidden][...]                 # bf16 (hid_pad, 2*split)
        b_head = params[2 * n_hidden + 1][...]             # f32  (1, 2*split)
        head = jnp.dot(h, w_head, preferred_element_type=jnp.float32) + b_head
        # split is a multiple of 128 -> both slices are lane-aligned views (no relayout)
        return head[:, :split], head[:, split:]

    # ---------------- Encoder ----------------
    mean, log_var = mlp_head(x_bf, enc, latent_pad)
    std = jnp.exp(0.5 * log_var)                           # == sqrt(exp(log_var))

    # Reparameterization: z = mean + eps * std   (padded cols: 0 + 0*1 = 0)
    z = mean + eps_ref[...].astype(jnp.float32) * std

    # ---------------- Decoder ----------------
    d_mean, d_log_var = mlp_head(z.astype(jnp.bfloat16), dec, input_pad)

    # reconstr_error = -sum_j log N(x_j | d_mean_j, exp(0.5*d_log_var_j)), log domain.
    diff = x_f32 - d_mean
    log_prob = (-0.5 * diff * diff * jnp.exp(-d_log_var)
                - 0.5 * d_log_var
                - 0.5 * jnp.log(2.0 * jnp.pi))
    in_mask = jax.lax.broadcasted_iota(jnp.int32, (1, input_pad), 1) < input_size
    reconstr_error = -jnp.sum(jnp.where(in_mask, log_prob, 0.0),
                              axis=1, keepdims=True)                    # (TB, 1)

    # KL term exactly as in the PyTorch forward (uses std, not variance, and the +1e-8).
    lat_mask = jax.lax.broadcasted_iota(jnp.int32, (1, latent_pad), 1) < latent_dim
    kl_terms = std - 1.0 - jnp.log(std + 1e-8) + mean * mean
    kl = 0.5 * jnp.sum(jnp.where(lat_mask, kl_terms, 0.0),
                       axis=1, keepdims=True)                           # (TB, 1)

    # Direct stores, no concatenate.
    re_ref[...] = reconstr_error
    kl_ref[...] = kl


# ----------------------------------------------------------------------------
# Wrapper
# ----------------------------------------------------------------------------
def vae_forward(x, eps, enc_packed, dec_packed, reconstr_error_weight, beta=1.0, *,
                input_size, latent_dim, block_b=256,
                vmem_limit_bytes=48 * 1024 * 1024,
                single_buffer_weights=False, core_parallel=False):
    """enc_packed / dec_packed: lane-padded packed lists (see pack_padded):
       [W0, b0, ..., W_{n-1}, b_{n-1}, W_head, b_head]
       weights bf16 (in_pad, out_pad); biases f32 (1, out_pad);
       W_head = [W_mean | W_log_var] with each half padded to a multiple of 128 columns."""
    B = x.shape[0]
    input_pad = _round_up(input_size, LANE)
    latent_pad = _round_up(latent_dim, LANE)
    n_hidden = len(enc_packed) // 2 - 1

    TB = min(block_b, B)
    assert B % TB == 0, "batch tile must divide B"
    assert TB == B or TB % 16 == 0, "batch tile must be a multiple of 16 (bf16 sublane pack)"

    # Lane-pad + cast the streamed activations once in the wrapper (bf16 halves HBM traffic).
    x_pad = jnp.zeros((B, input_pad), jnp.bfloat16).at[:, :input_size].set(
        x.astype(jnp.bfloat16))
    eps_pad = jnp.zeros((B, latent_pad), jnp.bfloat16).at[:, :latent_dim].set(
        eps.astype(jnp.bfloat16))

    params = list(enc_packed) + list(dec_packed)

    # Weights / biases: constant block index -> held resident in VMEM across grid steps.
    def _param_spec(shape):
        if single_buffer_weights:
            # v7x: avoid double-buffering read-only resident weights (VMEM headroom for big TB).
            return pl.BlockSpec(shape, lambda i: (0, 0), pipeline_mode=pl.Buffered(1))
        return pl.BlockSpec(shape, lambda i: (0, 0))

    in_specs = [
        pl.BlockSpec((TB, input_pad), lambda i: (i, 0)),    # x tile
        pl.BlockSpec((TB, latent_pad), lambda i: (i, 0)),   # eps tile
    ] + [_param_spec(p.shape) for p in params]

    out_shape = (jax.ShapeDtypeStruct((B, 1), jnp.float32),
                 jax.ShapeDtypeStruct((B, 1), jnp.float32))
    out_specs = (pl.BlockSpec((TB, 1), lambda i: (i, 0)),
                 pl.BlockSpec((TB, 1), lambda i: (i, 0)))

    kernel = functools.partial(
        _vae_kernel, n_hidden=n_hidden,
        latent_dim=latent_dim, latent_pad=latent_pad,
        input_size=input_size, input_pad=input_pad)

    batch_sem = pltpu.CORE_PARALLEL if core_parallel else "parallel"

    re2d, kl2d = pl.pallas_call(
        kernel,
        out_shape=out_shape,
        grid_spec=pltpu.PrefetchScalarGridSpec(
            num_scalar_prefetch=0,
            grid=(B // TB,),
            in_specs=in_specs,
            out_specs=out_specs,
        ),
        compiler_params=pltpu.CompilerParams(
            dimension_semantics=(batch_sem,),
            vmem_limit_bytes=vmem_limit_bytes),
    )(x_pad, eps_pad, *params)

    re = re2d[:, 0]
    kl = kl2d[:, 0]
    # Scalar ELBO computed in the wrapper: keeps the kernel free of cross-grid reductions
    # and avoids baking reconstr_error_weight / beta into the compiled kernel.
    average_negative_elbo = jnp.mean(reconstr_error_weight * re + beta * kl)
    return re, kl, average_negative_elbo


# ----------------------------------------------------------------------------
# Deterministic parameter construction (synthetic, matching nn.Linear shapes).
# ----------------------------------------------------------------------------
def _make_linear(key, din, dout):
    key, kw, kb = jax.random.split(key, 3)
    bound = 1.0 / (din ** 0.5)
    w = jax.random.uniform(kw, (din, dout), jnp.float32, -bound, bound)
    b = jax.random.uniform(kb, (1, dout), jnp.float32, -bound, bound)
    return (w, b), key


def init_mlp_params(key, in_dim, hidden_sizes, out_dim):
    """Unpadded f32 nn.Linear-style params: hidden layers + mean head + log_var head."""
    arch = [in_dim] + list(hidden_sizes)
    layers = []
    for din, dout in zip(arch[:-1], arch[1:]):
        (w, b), key = _make_linear(key, din, dout)
        layers.append((w, b))
    (wm, bm), key = _make_linear(key, arch[-1], out_dim)
    (wv, bv), key = _make_linear(key, arch[-1], out_dim)
    return dict(layers=layers, mean=(wm, bm), log_var=(wv, bv)), key


def pack_padded(params):
    """Pack to kernel layout: lane-padded bf16 weights (in_pad, out_pad), f32 biases (1, out_pad),
    fused mean||log_var head with a 128-aligned split (each half padded to out_pad columns)."""
    packed = []
    for (w, b) in params["layers"]:
        din, dout = w.shape
        din_p, dout_p = _round_up(din, LANE), _round_up(dout, LANE)
        wp = jnp.zeros((din_p, dout_p), jnp.float32).at[:din, :dout].set(w)
        bp = jnp.zeros((1, dout_p), jnp.float32).at[:, :dout].set(b)
        packed += [wp.astype(jnp.bfloat16), bp]
    (wm, bm), (wv, bv) = params["mean"], params["log_var"]
    din, dout = wm.shape
    din_p, dout_p = _round_up(din, LANE), _round_up(dout, LANE)
    wh = jnp.zeros((din_p, 2 * dout_p), jnp.float32)
    wh = wh.at[:din, :dout].set(wm).at[:din, dout_p:dout_p + dout].set(wv)
    bh = jnp.zeros((1, 2 * dout_p), jnp.float32)
    bh = bh.at[:, :dout].set(bm).at[:, dout_p:dout_p + dout].set(bv)
    packed += [wh.astype(jnp.bfloat16), bh]
    return packed


# ----------------------------------------------------------------------------
# Pure-JAX reference on the UNPADDED params (same bf16 matmul precision, original
# sqrt(exp)/divide/log(std) formulation) — validates padding, masking and the
# log-domain rewrite end-to-end.
# ----------------------------------------------------------------------------
def _mlp_ref(h, params):
    for (w, b) in params["layers"]:
        h = jnp.dot(h.astype(jnp.bfloat16), w.astype(jnp.bfloat16),
                    preferred_element_type=jnp.float32) + b
        h = jnp.maximum(h, LEAKY_SLOPE * h)
    hb = h.astype(jnp.bfloat16)
    (wm, bm), (wv, bv) = params["mean"], params["log_var"]
    mean = jnp.dot(hb, wm.astype(jnp.bfloat16), preferred_element_type=jnp.float32) + bm
    log_var = jnp.dot(hb, wv.astype(jnp.bfloat16), preferred_element_type=jnp.float32) + bv
    return mean, log_var


def vae_forward_ref(x, eps, enc_params, dec_params, reconstr_error_weight, beta):
    # Match the kernel's bf16 streaming of x / eps.
    xf = x.astype(jnp.bfloat16).astype(jnp.float32)
    ef = eps.astype(jnp.bfloat16).astype(jnp.float32)
    mean, log_var = _mlp_ref(xf, enc_params)
    std = jnp.sqrt(jnp.exp(log_var))
    z = mean + ef * std
    d_mean, d_log_var = _mlp_ref(z, dec_params)
    d_std = jnp.sqrt(jnp.exp(d_log_var))
    lp = (-((xf - d_mean) ** 2) / (2.0 * d_std ** 2)
          - jnp.log(d_std) - 0.5 * jnp.log(2.0 * jnp.pi))
    re = -jnp.sum(lp, axis=1)
    kl = 0.5 * jnp.sum(std - 1.0 - jnp.log(std + 1e-8) + mean * mean, axis=1)
    elbo = jnp.mean(reconstr_error_weight * re + beta * kl)
    return re, kl, elbo


if __name__ == "__main__":
    B = 256                      # small, but enough to fill MXU rows (review: never TB=8)
    input_size = 16
    hidden_sizes = [32]
    latent_dim = 8
    reconstr_error_weight = 1.0
    beta = 1.0

    key = jax.random.PRNGKey(0)
    enc_params, key = init_mlp_params(key, input_size, hidden_sizes, latent_dim)
    dec_params, key = init_mlp_params(key, latent_dim, hidden_sizes, input_size)
    enc_packed = pack_padded(enc_params)
    dec_packed = pack_padded(dec_params)

    key, kx, keps = jax.random.split(key, 3)
    x = jax.random.normal(kx, (B, input_size), jnp.float32)
    eps = jax.random.normal(keps, (B, latent_dim), jnp.float32)   # torch.randn equivalent

    # block_b=128 -> grid of 2 batch tiles, exercises the pipelined grid on all generations.
    re, kl, elbo = vae_forward(x, eps, enc_packed, dec_packed,
                               reconstr_error_weight, beta,
                               input_size=input_size, latent_dim=latent_dim,
                               block_b=128)
    jax.block_until_ready((re, kl, elbo))

    re_r, kl_r, elbo_r = vae_forward_ref(x, eps, enc_params, dec_params,
                                         reconstr_error_weight, beta)
    assert re.shape == (B,) and kl.shape == (B,) and elbo.shape == ()
    assert jnp.allclose(re, re_r, rtol=1e-3, atol=1e-3), "reconstr_error mismatch"
    assert jnp.allclose(kl, kl_r, rtol=1e-3, atol=1e-3), "kl mismatch"
    assert jnp.allclose(elbo, elbo_r, rtol=1e-3, atol=1e-3), "elbo mismatch"

    print("KERNEL_OK")
</pallas_src>

<mosaic_0001>
module attributes {stable_mosaic.version = 11 : i64} {
  func.func @_vae_kernel(%arg0: i32, %arg1: memref<128x128xbf16, #tpu.memory_space<vmem>>, %arg2: memref<128x128xbf16, #tpu.memory_space<vmem>>, %arg3: memref<128x128xbf16, #tpu.memory_space<vmem>>, %arg4: memref<1x128xf32, #tpu.memory_space<vmem>>, %arg5: memref<128x256xbf16, #tpu.memory_space<vmem>>, %arg6: memref<1x256xf32, #tpu.memory_space<vmem>>, %arg7: memref<128x128xbf16, #tpu.memory_space<vmem>>, %arg8: memref<1x128xf32, #tpu.memory_space<vmem>>, %arg9: memref<128x256xbf16, #tpu.memory_space<vmem>>, %arg10: memref<1x256xf32, #tpu.memory_space<vmem>>, %arg11: memref<128x1xf32, #tpu.memory_space<vmem>>, %arg12: memref<128x1xf32, #tpu.memory_space<vmem>>) attributes {dimension_semantics = [#tpu.dimension_semantics<parallel>], iteration_bounds = array<i64: 2>, scalar_prefetch = 0 : i64, scratch_operands = 0 : i64, tpu.core_type = #tpu.core_type<tc>, window_params = [{transform_indices = @transform_0, window_bounds = array<i64: 128, 128>}, {transform_indices = @transform_1, window_bounds = array<i64: 128, 128>}, {pipeline_mode = #tpu.pipeline_mode<synchronous>, transform_indices = @transform_2, window_bounds = array<i64: 128, 128>}, {pipeline_mode = #tpu.pipeline_mode<synchronous>, transform_indices = @transform_3, window_bounds = array<i64: 1, 128>}, {pipeline_mode = #tpu.pipeline_mode<synchronous>, transform_indices = @transform_4, window_bounds = array<i64: 128, 256>}, {pipeline_mode = #tpu.pipeline_mode<synchronous>, transform_indices = @transform_5, window_bounds = array<i64: 1, 256>}, {pipeline_mode = #tpu.pipeline_mode<synchronous>, transform_indices = @transform_6, window_bounds = array<i64: 128, 128>}, {pipeline_mode = #tpu.pipeline_mode<synchronous>, transform_indices = @transform_7, window_bounds = array<i64: 1, 128>}, {pipeline_mode = #tpu.pipeline_mode<synchronous>, transform_indices = @transform_8, window_bounds = array<i64: 128, 256>}, {pipeline_mode = #tpu.pipeline_mode<synchronous>, transform_indices = @transform_9, window_bounds = array<i64: 1, 256>}, {transform_indices = @transform_10, window_bounds = array<i64: 128, 1>}, {transform_indices = @transform_11, window_bounds = array<i64: 128, 1>}]} {
    %c0 = arith.constant 0 : index
    %c0_0 = arith.constant 0 : index
    %0 = vector.load %arg1[%c0, %c0_0] : memref<128x128xbf16, #tpu.memory_space<vmem>>, vector<128x128xbf16>
    %1 = arith.extf %0 : vector<128x128xbf16> to vector<128x128xf32>
    %c0_1 = arith.constant 0 : index
    %c0_2 = arith.constant 0 : index
    %2 = vector.load %arg3[%c0_1, %c0_2] : memref<128x128xbf16, #tpu.memory_space<vmem>>, vector<128x128xbf16>
    %c0_3 = arith.constant 0 : index
    %c0_4 = arith.constant 0 : index
    %3 = vector.load %arg4[%c0_3, %c0_4] : memref<1x128xf32, #tpu.memory_space<vmem>>, vector<1x128xf32>
    %cst = arith.constant dense<0.000000e+00> : vector<128x128xf32>
    %4 = tpu.matmul %0, %2, %cst {dimension_numbers = #tpu.dot_dimension_numbers<[1], [0], [0], [1], [0, 0, 1, 1], [], []>} : vector<128x128xbf16>, vector<128x128xbf16>, vector<128x128xf32> -> vector<128x128xf32>
    %5 = vector.broadcast %3 : vector<1x128xf32> to vector<128x128xf32>
    %6 = arith.addf %4, %5 : vector<128x128xf32>
    %cst_5 = arith.constant 0.00999999977 : f32
    %7 = vector.broadcast %cst_5 : f32 to vector<128x128xf32>
    %8 = arith.mulf %7, %6 : vector<128x128xf32>
    %9 = arith.maximumf %6, %8 : vector<128x128xf32>
    %10 = arith.truncf %9 : vector<128x128xf32> to vector<128x128xbf16>
    %c0_6 = arith.constant 0 : index
    %c0_7 = arith.constant 0 : index
    %11 = vector.load %arg5[%c0_6, %c0_7] : memref<128x256xbf16, #tpu.memory_space<vmem>>, vector<128x256xbf16>
    %c0_8 = arith.constant 0 : index
    %c0_9 = arith.constant 0 : index
    %12 = vector.load %arg6[%c0_8, %c0_9] : memref<1x256xf32, #tpu.memory_space<vmem>>, vector<1x256xf32>
    %cst_10 = arith.constant dense<0.000000e+00> : vector<128x256xf32>
    %13 = tpu.matmul %10, %11, %cst_10 {dimension_numbers = #tpu.dot_dimension_numbers<[1], [0], [0], [1], [0, 0, 1, 1], [], []>} : vector<128x128xbf16>, vector<128x256xbf16>, vector<128x256xf32> -> vector<128x256xf32>
    %14 = vector.broadcast %12 : vector<1x256xf32> to vector<128x256xf32>
    %15 = arith.addf %13, %14 : vector<128x256xf32>
    %16 = vector.extract_strided_slice %15 {offsets = [0, 0], sizes = [128, 128], strides = [1, 1]} : vector<128x256xf32> to vector<128x128xf32>
    %17 = vector.extract_strided_slice %15 {offsets = [0, 128], sizes = [128, 128], strides = [1, 1]} : vector<128x256xf32> to vector<128x128xf32>
    %cst_11 = arith.constant 5.000000e-01 : f32
    %18 = vector.broadcast %cst_11 : f32 to vector<128x128xf32>
    %19 = arith.mulf %18, %17 : vector<128x128xf32>
    %20 = math.exp %19 : vector<128x128xf32>
    %c0_12 = arith.constant 0 : index
    %c0_13 = arith.constant 0 : index
    %21 = vector.load %arg2[%c0_12, %c0_13] : memref<128x128xbf16, #tpu.memory_space<vmem>>, vector<128x128xbf16>
    %22 = arith.extf %21 : vector<128x128xbf16> to vector<128x128xf32>
    %23 = arith.mulf %22, %20 : vector<128x128xf32>
    %24 = arith.addf %16, %23 : vector<128x128xf32>
    %25 = arith.truncf %24 : vector<128x128xf32> to vector<128x128xbf16>
    %c0_14 = arith.constant 0 : index
    %c0_15 = arith.constant 0 : index
    %26 = vector.load %arg7[%c0_14, %c0_15] : memref<128x128xbf16, #tpu.memory_space<vmem>>, vector<128x128xbf16>
    %c0_16 = arith.constant 0 : index
    %c0_17 = arith.constant 0 : index
    %27 = vector.load %arg8[%c0_16, %c0_17] : memref<1x128xf32, #tpu.memory_space<vmem>>, vector<1x128xf32>
    %cst_18 = arith.constant dense<0.000000e+00> : vector<128x128xf32>
    %28 = tpu.matmul %25, %26, %cst_18 {dimension_numbers = #tpu.dot_dimension_numbers<[1], [0], [0], [1], [0, 0, 1, 1], [], []>} : vector<128x128xbf16>, vector<128x128xbf16>, vector<128x128xf32> -> vector<128x128xf32>
    %29 = vector.broadcast %27 : vector<1x128xf32> to vector<128x128xf32>
    %30 = arith.addf %28, %29 : vector<128x128xf32>
    %cst_19 = arith.constant 0.00999999977 : f32
    %31 = vector.broadcast %cst_19 : f32 to vector<128x128xf32>
    %32 = arith.mulf %31, %30 : vector<128x128xf32>
    %33 = arith.maximumf %30, %32 : vector<128x128xf32>
    %34 = arith.truncf %33 : vector<128x128xf32> to vector<128x128xbf16>
    %c0_20 = arith.constant 0 : index
    %c0_21 = arith.constant 0 : index
    %35 = vector.load %arg9[%c0_20, %c0_21] : memref<128x256xbf16, #tpu.memory_space<vmem>>, vector<128x256xbf16>
    %c0_22 = arith.constant 0 : index
    %c0_23 = arith.constant 0 : index
    %36 = vector.load %arg10[%c0_22, %c0_23] : memref<1x256xf32, #tpu.memory_space<vmem>>, vector<1x256xf32>
    %cst_24 = arith.constant dense<0.000000e+00> : vector<128x256xf32>
    %37 = tpu.matmul %34, %35, %cst_24 {dimension_numbers = #tpu.dot_dimension_numbers<[1], [0], [0], [1], [0, 0, 1, 1], [], []>} : vector<128x128xbf16>, vector<128x256xbf16>, vector<128x256xf32> -> vector<128x256xf32>
    %38 = vector.broadcast %36 : vector<1x256xf32> to vector<128x256xf32>
    %39 = arith.addf %37, %38 : vector<128x256xf32>
    %40 = vector.extract_strided_slice %39 {offsets = [0, 0], sizes = [128, 128], strides = [1, 1]} : vector<128x256xf32> to vector<128x128xf32>
    %41 = vector.extract_strided_slice %39 {offsets = [0, 128], sizes = [128, 128], strides = [1, 1]} : vector<128x256xf32> to vector<128x128xf32>
    %42 = arith.subf %1, %40 : vector<128x128xf32>
    %cst_25 = arith.constant -5.000000e-01 : f32
    %43 = vector.broadcast %cst_25 : f32 to vector<128x128xf32>
    %44 = arith.mulf %43, %42 : vector<128x128xf32>
    %45 = arith.mulf %44, %42 : vector<128x128xf32>
    %cst_26 = arith.constant 0.000000e+00 : f32
    %46 = vector.broadcast %cst_26 : f32 to vector<128x128xf32>
    %47 = arith.subf %46, %41 : vector<128x128xf32>
    %48 = math.exp %47 : vector<128x128xf32>
    %49 = arith.mulf %45, %48 : vector<128x128xf32>
    %cst_27 = arith.constant 5.000000e-01 : f32
    %50 = vector.broadcast %cst_27 : f32 to vector<128x128xf32>
    %51 = arith.mulf %50, %41 : vector<128x128xf32>
    %52 = arith.subf %49, %51 : vector<128x128xf32>
    %cst_28 = arith.constant 6.28318548 : f32
    %53 = math.log %cst_28 : f32
    %cst_29 = arith.constant 5.000000e-01 : f32
    %54 = arith.mulf %cst_29, %53 : f32
    %55 = vector.broadcast %54 : f32 to vector<128x128xf32>
    %56 = arith.subf %52, %55 : vector<128x128xf32>
    %57 = tpu.iota {dimensions = array<i32: 1>} : vector<1x128xi32>
    %c16_i32 = arith.constant 16 : i32
    %58 = vector.broadcast %c16_i32 : i32 to vector<1x128xi32>
    %59 = arith.cmpi slt, %57, %58 : vector<1x128xi32>
    %cst_30 = arith.constant 0.000000e+00 : f32
    %60 = vector.shape_cast %59 : vector<1x128xi1> to vector<1x128xi1>
    %61 = vector.broadcast %60 : vector<1x128xi1> to vector<128x128xi1>
    %62 = vector.broadcast %cst_30 : f32 to vector<128x128xf32>
    %63 = arith.select %61, %56, %62 : vector<128x128xi1>, vector<128x128xf32>
    %cst_31 = arith.constant dense<0.000000e+00> : vector<128xf32>
    %64 = vector.multi_reduction <add>, %63, %cst_31 [1] : vector<128x128xf32> to vector<128xf32>
    %65 = vector.shape_cast %64 : vector<128xf32> to vector<128x1xf32>
    %cst_32 = arith.constant 0.000000e+00 : f32
    %66 = vector.broadcast %cst_32 : f32 to vector<128x1xf32>
    %67 = arith.subf %66, %65 : vector<128x1xf32>
    %68 = tpu.iota {dimensions = array<i32: 1>} : vector<1x128xi32>
    %c8_i32 = arith.constant 8 : i32
    %69 = vector.broadcast %c8_i32 : i32 to vector<1x128xi32>
    %70 = arith.cmpi slt, %68, %69 : vector<1x128xi32>
    %cst_33 = arith.constant 1.000000e+00 : f32
    %71 = vector.broadcast %cst_33 : f32 to vector<128x128xf32>
    %72 = arith.subf %20, %71 : vector<128x128xf32>
    %cst_34 = arith.constant 9.99999993E-9 : f32
    %73 = vector.broadcast %cst_34 : f32 to vector<128x128xf32>
    %74 = arith.addf %20, %73 : vector<128x128xf32>
    %75 = math.log %74 : vector<128x128xf32>
    %76 = arith.subf %72, %75 : vector<128x128xf32>
    %77 = arith.mulf %16, %16 : vector<128x128xf32>
    %78 = arith.addf %76, %77 : vector<128x128xf32>
    %cst_35 = arith.constant 0.000000e+00 : f32
    %79 = vector.shape_cast %70 : vector<1x128xi1> to vector<1x128xi1>
    %80 = vector.broadcast %79 : vector<1x128xi1> to vector<128x128xi1>
    %81 = vector.broadcast %cst_35 : f32 to vector<128x128xf32>
    %82 = arith.select %80, %78, %81 : vector<128x128xi1>, vector<128x128xf32>
    %cst_36 = arith.constant dense<0.000000e+00> : vector<128xf32>
    %83 = vector.multi_reduction <add>, %82, %cst_36 [1] : vector<128x128xf32> to vector<128xf32>
    %84 = vector.shape_cast %83 : vector<128xf32> to vector<128x1xf32>
    %cst_37 = arith.constant 5.000000e-01 : f32
    %85 = vector.broadcast %cst_37 : f32 to vector<128x1xf32>
    %86 = arith.mulf %85, %84 : vector<128x1xf32>
    %c0_38 = arith.constant 0 : index
    %c0_39 = arith.constant 0 : index
    %87 = vector.load %arg11[%c0_38, %c0_39] : memref<128x1xf32, #tpu.memory_space<vmem>>, vector<128x1xf32>
    tpu.vector_store %arg11[%c0_38, %c0_39], %67 {strides = array<i32>} : memref<128x1xf32, #tpu.memory_space<vmem>>, vector<128x1xf32>,
    %c0_40 = arith.constant 0 : index
    %c0_41 = arith.constant 0 : index
    %88 = vector.load %arg12[%c0_40, %c0_41] : memref<128x1xf32, #tpu.memory_space<vmem>>, vector<128x1xf32>
    tpu.vector_store %arg12[%c0_40, %c0_41], %86 {strides = array<i32>} : memref<128x1xf32, #tpu.memory_space<vmem>>, vector<128x1xf32>,
    return
  }
  func.func @transform_0(%arg0: i32) -> (i32, i32) {
    %c0_i32 = arith.constant 0 : i32
    %c0_i32_0 = arith.constant 0 : i32
    return %arg0, %c0_i32 : i32, i32
  }
  func.func @transform_1(%arg0: i32) -> (i32, i32) {
    %c0_i32 = arith.constant 0 : i32
    %c0_i32_0 = arith.constant 0 : i32
    return %arg0, %c0_i32 : i32, i32
  }
  func.func @transform_2(%arg0: i32) -> (i32, i32) {
    %c0_i32 = arith.constant 0 : i32
    %c0_i32_0 = arith.constant 0 : i32
    %c0_i32_1 = arith.constant 0 : i32
    return %c0_i32, %c0_i32_0 : i32, i32
  }
  func.func @transform_3(%arg0: i32) -> (i32, i32) {
    %c0_i32 = arith.constant 0 : i32
    %c0_i32_0 = arith.constant 0 : i32
    %c0_i32_1 = arith.constant 0 : i32
    return %c0_i32, %c0_i32_0 : i32, i32
  }
  func.func @transform_4(%arg0: i32) -> (i32, i32) {
    %c0_i32 = arith.constant 0 : i32
    %c0_i32_0 = arith.constant 0 : i32
    %c0_i32_1 = arith.constant 0 : i32
    return %c0_i32, %c0_i32_0 : i32, i32
  }
  func.func @transform_5(%arg0: i32) -> (i32, i32) {
    %c0_i32 = arith.constant 0 : i32
    %c0_i32_0 = arith.constant 0 : i32
    %c0_i32_1 = arith.constant 0 : i32
    return %c0_i32, %c0_i32_0 : i32, i32
  }
  func.func @transform_6(%arg0: i32) -> (i32, i32) {
    %c0_i32 = arith.constant 0 : i32
    %c0_i32_0 = arith.constant 0 : i32
    %c0_i32_1 = arith.constant 0 : i32
    return %c0_i32, %c0_i32_0 : i32, i32
  }
  func.func @transform_7(%arg0: i32) -> (i32, i32) {
    %c0_i32 = arith.constant 0 : i32
    %c0_i32_0 = arith.constant 0 : i32
    %c0_i32_1 = arith.constant 0 : i32
    return %c0_i32, %c0_i32_0 : i32, i32
  }
  func.func @transform_8(%arg0: i32) -> (i32, i32) {
    %c0_i32 = arith.constant 0 : i32
    %c0_i32_0 = arith.constant 0 : i32
    %c0_i32_1 = arith.constant 0 : i32
    return %c0_i32, %c0_i32_0 : i32, i32
  }
  func.func @transform_9(%arg0: i32) -> (i32, i32) {
    %c0_i32 = arith.constant 0 : i32
    %c0_i32_0 = arith.constant 0 : i32
    %c0_i32_1 = arith.constant 0 : i32
    return %c0_i32, %c0_i32_0 : i32, i32
  }
  func.func @transform_10(%arg0: i32) -> (i32, i32) {
    %c0_i32 = arith.constant 0 : i32
    %c0_i32_0 = arith.constant 0 : i32
    return %arg0, %c0_i32 : i32, i32
  }
  func.func @transform_11(%arg0: i32) -> (i32, i32) {
    %c0_i32 = arith.constant 0 : i32
    %c0_i32_0 = arith.constant 0 : i32
    return %arg0, %c0_i32 : i32, i32
  }
}

</mosaic_0001>

<llo_original>
// kernel: tpu_custom_call.1
$region0: #{tpu_custom_call.1}
  #allocation0 [shape = 'u32[]', space=smem, size = 0x4, offset = 0x4, fixed_abs, tag = 'smem constant byte address 0x4 - core index']
  #allocation1 [shape = 'u32[144,128]{1,0:T(1,128)}', space=vmem, size = 0x12000, scoped, tag = 'internal scratch']
  %s0 = inlined_call_operand.hbm [shape: bf16[256,128], index: 0, kind: input, shape index: {}]
  %s1 = inlined_call_operand.hbm [shape: bf16[256,128], index: 1, kind: input, shape index: {}]
  %s2 = inlined_call_operand.hbm [shape: bf16[128,128], index: 2, kind: input, shape index: {}]
  %s3 = inlined_call_operand.vmem [shape: f32[1,128], index: 3, kind: input, shape index: {}]
  %s4 = inlined_call_operand.hbm [shape: bf16[128,256], index: 4, kind: input, shape index: {}]
  %s5 = inlined_call_operand.vmem [shape: f32[1,256], index: 5, kind: input, shape index: {}]
  %s6 = inlined_call_operand.hbm [shape: bf16[128,128], index: 6, kind: input, shape index: {}]
  %s7 = inlined_call_operand.vmem [shape: f32[1,128], index: 7, kind: input, shape index: {}]
  %s8 = inlined_call_operand.hbm [shape: bf16[128,256], index: 8, kind: input, shape index: {}]
  %s9 = inlined_call_operand.vmem [shape: f32[1,256], index: 9, kind: input, shape index: {}]
  %s10 = inlined_call_operand.vmem [shape: f32[256,1], index: 10, kind: output, shape index: {0}]
  %s11 = inlined_call_operand.vmem [shape: f32[256,1], index: 11, kind: output, shape index: {1}]
  %12 = xla_tuple %s10, %s11
  %s13 = sld [smem:[#allocation0]]
  $region105: #{tpu_custom_call.1} parent=0
    _
  %s15 = ssub.s32 1, %s13
  %s16 = scalar_select 0, %s15, %s13
  $region1: #{tpu_custom_call.1} parent=0
    #allocation2 [shape = 'u8[65536]{0}', space=vmem, size = 0x10000, scoped, tag = 'input window, operand 0']
    #allocation3 [shape = 's32[2]{0}', space=sflag, size = 0x8, scoped, tag = 'scoped memory for tpu_custom_call.1']
    #allocation4 [shape = 'u8[65536]{0}', space=vmem, size = 0x10000, scoped, tag = 'input window, operand 1']
    #allocation5 [shape = 's32[2]{0}', space=sflag, size = 0x8, scoped, tag = 'scoped memory for tpu_custom_call.1']
    #allocation6 [shape = 'u8[32768]{0}', space=vmem, size = 0x8000, scoped, tag = 'input window, operand 2, single buffered']
    #allocation7 [shape = 'u8[65536]{0}', space=vmem, size = 0x10000, scoped, tag = 'input window, operand 4, single buffered']
    #allocation8 [shape = 's32[1]{0}', space=sflag, size = 0x4, scoped, tag = 'scoped memory for tpu_custom_call.1']
    #allocation9 [shape = 'u8[32768]{0}', space=vmem, size = 0x8000, scoped, tag = 'input window, operand 6, single buffered']
    #allocation10 [shape = 'u8[65536]{0}', space=vmem, size = 0x10000, scoped, tag = 'input window, operand 8, single buffered']
    #allocation11 [shape = 's32[1]{0}', space=sflag, size = 0x4, scoped, tag = 'scoped memory for tpu_custom_call.1']
    %17 = vsyncpa [#allocation3], 0
    %s18 = scalar_lea.sflag [#allocation3], 1
    %19 = vsyncpa %s18, 0
    %20 = vsyncpa [#allocation5], 0
    %s21 = scalar_lea.sflag [#allocation5], 1
    %22 = vsyncpa %s21, 0
    %23 = vsyncpa [#allocation8], 0
    %24 = vsyncpa [#allocation11], 0
    loop: start=0, step=1, limit=4
    $region2: #{tpu_custom_call.1} parent=1 // loop_pre_header
      _
    $region3: #{tpu_custom_call.1} parent=1 // loop_header
      %s26 = sphi 0, %s30
      %p27 = scmp.ge.s32.totalorder %s26, 4
      %s36 = sphi 0, %s38
      %s39 = sphi 0, %s36
      %s40 = sphi 0, %s39
      %s56 = sphi 0, %s40
      %s62 = sphi 0, %s64
      %s65 = sphi 0, %s62
      %s66 = sphi 0, %s65
      %s82 = sphi 0, %s66
      %s86 = sphi 0, %s86
      %s88 = sphi 0, %s86
      %s89 = sphi 0, %s88
      %s103 = sphi 0, %s89
      %s107 = sphi 0, %s107
      %s109 = sphi 0, %s107
      %s110 = sphi 0, %s109
      %s124 = sphi 0, %s110
      %s128 = sphi 0, %s128
      %s130 = sphi 0, %s128
      %s131 = sphi 0, %s130
      %s145 = sphi 0, %s131
      %s149 = sphi 0, %s149
      %s151 = sphi 0, %s149
      %s152 = sphi 0, %s151
      %s166 = sphi 0, %s152
      %s170 = sphi 0, %s170
      %s172 = sphi 0, %s170
      %s173 = sphi 0, %s172
      %s187 = sphi 0, %s173
      %s191 = sphi 0, %s191
      %s193 = sphi 0, %s191
      %s194 = sphi 0, %s193
      %s208 = sphi 0, %s194
      %s212 = sphi 0, %s212
      %s214 = sphi 0, %s212
      %s215 = sphi 0, %s214
      %s229 = sphi 0, %s215
      %s233 = sphi 0, %s233
      %s235 = sphi 0, %s233
      %s236 = sphi 0, %s235
      %s250 = sphi 0, %s236
      %s256 = sphi 0, %s258
      %s259 = sphi 0, %s256
      %s260 = sphi 0, %s259
      %s276 = sphi 0, %s260
      %s282 = sphi 0, %s284
      %s285 = sphi 0, %s282
      %s286 = sphi 0, %s285
      %s302 = sphi 0, %s286
    $region4: #{tpu_custom_call.1} parent=1 // loop_header_branch
      %29 = sbr.rel (%p27) target = $region8
    $region5: #{tpu_custom_call.1} parent=1 // loop_body
      %s31 = ssub.s32 %s26, 1
      %s32 = ssub.s32 %s26, 2
      %s33 = sadd.s32 %s26, 1
      %s34 = ssub.s32 %s26, %s33
      %p35 = scmp.eq.s32.totalorder %s34, 0
      %s37 = sadd.s32 %s36, 1
      %s38 = scalar_select %p35, %s36, %s37
      %p41 = pneg %p35
      %p42 = scmp.eq.s32.totalorder %s26, 1
      %p43 = por %p41, %p42
      %p44 = scmp.ne.s32.totalorder %s36, %s39
      %p45 = scmp.eq.s32.totalorder %s26, 0
      %p46 = por %p44, %p45
      %p47 = scmp.ne.s32.totalorder %s36, %s39
      %p48 = scmp.eq.s32.totalorder %s31, 1
      %p49 = por %p47, %p48
      %p50 = scmp.ne.s32.totalorder %s39, %s40
      %p51 = scmp.eq.s32.totalorder %s31, 0
      %p52 = por %p50, %p51
      %p53 = scmp.ne.s32.totalorder %s39, %s40
      %p54 = scmp.eq.s32.totalorder %s32, 1
      %p55 = por %p53, %p54
      %p57 = scmp.ne.s32.totalorder %s40, %s56
      %p58 = scmp.eq.s32.totalorder %s32, 0
      %p59 = por %p57, %p58
      %s60 = ssub.s32 %s26, %s33
      %p61 = scmp.eq.s32.totalorder %s60, 0
      %s63 = sadd.s32 %s62, 1
      %s64 = scalar_select %p61, %s62, %s63
      %p67 = pneg %p61
      %p68 = scmp.eq.s32.totalorder %s26, 1
      %p69 = por %p67, %p68
      %p70 = scmp.ne.s32.totalorder %s62, %s65
      %p71 = scmp.eq.s32.totalorder %s26, 0
      %p72 = por %p70, %p71
      %p73 = scmp.ne.s32.totalorder %s62, %s65
      %p74 = scmp.eq.s32.totalorder %s31, 1
      %p75 = por %p73, %p74
      %p76 = scmp.ne.s32.totalorder %s65, %s66
      %p77 = scmp.eq.s32.totalorder %s31, 0
      %p78 = por %p76, %p77
      %p79 = scmp.ne.s32.totalorder %s65, %s66
      %p80 = scmp.eq.s32.totalorder %s32, 1
      %p81 = por %p79, %p80
      %p83 = scmp.ne.s32.totalorder %s66, %s82
      %p84 = scmp.eq.s32.totalorder %s32, 0
      %p85 = por %p83, %p84
      %s87 = sadd.s32 %s86, 1
      %p90 = scmp.eq.s32.totalorder %s26, 1
      %p91 = scmp.ne.s32.totalorder %s86, %s88
      %p92 = scmp.eq.s32.totalorder %s26, 0
      %p93 = por %p91, %p92
      %p94 = scmp.ne.s32.totalorder %s86, %s88
      %p95 = scmp.eq.s32.totalorder %s31, 1
      %p96 = por %p94, %p95
      %p97 = scmp.ne.s32.totalorder %s88, %s89
      %p98 = scmp.eq.s32.totalorder %s31, 0
      %p99 = por %p97, %p98
      %p100 = scmp.ne.s32.totalorder %s88, %s89
      %p101 = scmp.eq.s32.totalorder %s32, 1
      %p102 = por %p100, %p101
      %p104 = scmp.ne.s32.totalorder %s89, %s103
      %p105 = scmp.eq.s32.totalorder %s32, 0
      %p106 = por %p104, %p105
      %s108 = sadd.s32 %s107, 1
      %p111 = scmp.eq.s32.totalorder %s26, 1
      %p112 = scmp.ne.s32.totalorder %s107, %s109
      %p113 = scmp.eq.s32.totalorder %s26, 0
      %p114 = por %p112, %p113
      %p115 = scmp.ne.s32.totalorder %s107, %s109
      %p116 = scmp.eq.s32.totalorder %s31, 1
      %p117 = por %p115, %p116
      %p118 = scmp.ne.s32.totalorder %s109, %s110
      %p119 = scmp.eq.s32.totalorder %s31, 0
      %p120 = por %p118, %p119
      %p121 = scmp.ne.s32.totalorder %s109, %s110
      %p122 = scmp.eq.s32.totalorder %s32, 1
      %p123 = por %p121, %p122
      %p125 = scmp.ne.s32.totalorder %s110, %s124
      %p126 = scmp.eq.s32.totalorder %s32, 0
      %p127 = por %p125, %p126
      %s129 = sadd.s32 %s128, 1
      %p132 = scmp.eq.s32.totalorder %s26, 1
      %p133 = scmp.ne.s32.totalorder %s128, %s130
      %p134 = scmp.eq.s32.totalorder %s26, 0
      %p135 = por %p133, %p134
      %p136 = scmp.ne.s32.totalorder %s128, %s130
      %p137 = scmp.eq.s32.totalorder %s31, 1
      %p138 = por %p136, %p137
      %p139 = scmp.ne.s32.totalorder %s130, %s131
      %p140 = scmp.eq.s32.totalorder %s31, 0
      %p141 = por %p139, %p140
      %p142 = scmp.ne.s32.totalorder %s130, %s131
      %p143 = scmp.eq.s32.totalorder %s32, 1
      %p144 = por %p142, %p143
      %p146 = scmp.ne.s32.totalorder %s131, %s145
      %p147 = scmp.eq.s32.totalorder %s32, 0
      %p148 = por %p146, %p147
      %s150 = sadd.s32 %s149, 1
      %p153 = scmp.eq.s32.totalorder %s26, 1
      %p154 = scmp.ne.s32.totalorder %s149, %s151
      %p155 = scmp.eq.s32.totalorder %s26, 0
      %p156 = por %p154, %p155
      %p157 = scmp.ne.s32.totalorder %s149, %s151
      %p158 = scmp.eq.s32.totalorder %s31, 1
      %p159 = por %p157, %p158
      %p160 = scmp.ne.s32.totalorder %s151, %s152
      %p161 = scmp.eq.s32.totalorder %s31, 0
      %p162 = por %p160, %p161
      %p163 = scmp.ne.s32.totalorder %s151, %s152
      %p164 = scmp.eq.s32.totalorder %s32, 1
      %p165 = por %p163, %p164
      %p167 = scmp.ne.s32.totalorder %s152, %s166
      %p168 = scmp.eq.s32.totalorder %s32, 0
      %p169 = por %p167, %p168
      %s171 = sadd.s32 %s170, 1
      %p174 = scmp.eq.s32.totalorder %s26, 1
      %p175 = scmp.ne.s32.totalorder %s170, %s172
      %p176 = scmp.eq.s32.totalorder %s26, 0
      %p177 = por %p175, %p176
      %p178 = scmp.ne.s32.totalorder %s170, %s172
      %p179 = scmp.eq.s32.totalorder %s31, 1
      %p180 = por %p178, %p179
      %p181 = scmp.ne.s32.totalorder %s172, %s173
      %p182 = scmp.eq.s32.totalorder %s31, 0
      %p183 = por %p181, %p182
      %p184 = scmp.ne.s32.totalorder %s172, %s173
      %p185 = scmp.eq.s32.totalorder %s32, 1
      %p186 = por %p184, %p185
      %p188 = scmp.ne.s32.totalorder %s173, %s187
      %p189 = scmp.eq.s32.totalorder %s32, 0
      %p190 = por %p188, %p189
      %s192 = sadd.s32 %s191, 1
      %p195 = scmp.eq.s32.totalorder %s26, 1
      %p196 = scmp.ne.s32.totalorder %s191, %s193
      %p197 = scmp.eq.s32.totalorder %s26, 0
      %p198 = por %p196, %p197
      %p199 = scmp.ne.s32.totalorder %s191, %s193
      %p200 = scmp.eq.s32.totalorder %s31, 1
      %p201 = por %p199, %p200
      %p202 = scmp.ne.s32.totalorder %s193, %s194
      %p203 = scmp.eq.s32.totalorder %s31, 0
      %p204 = por %p202, %p203
      %p205 = scmp.ne.s32.totalorder %s193, %s194
      %p206 = scmp.eq.s32.totalorder %s32, 1
      %p207 = por %p205, %p206
      %p209 = scmp.ne.s32.totalorder %s194, %s208
      %p210 = scmp.eq.s32.totalorder %s32, 0
      %p211 = por %p209, %p210
      %s213 = sadd.s32 %s212, 1
      %p216 = scmp.eq.s32.totalorder %s26, 1
      %p217 = scmp.ne.s32.totalorder %s212, %s214
      %p218 = scmp.eq.s32.totalorder %s26, 0
      %p219 = por %p217, %p218
      %p220 = scmp.ne.s32.totalorder %s212, %s214
      %p221 = scmp.eq.s32.totalorder %s31, 1
      %p222 = por %p220, %p221
      %p223 = scmp.ne.s32.totalorder %s214, %s215
      %p224 = scmp.eq.s32.totalorder %s31, 0
      %p225 = por %p223, %p224
      %p226 = scmp.ne.s32.totalorder %s214, %s215
      %p227 = scmp.eq.s32.totalorder %s32, 1
      %p228 = por %p226, %p227
      %p230 = scmp.ne.s32.totalorder %s215, %s229
      %p231 = scmp.eq.s32.totalorder %s32, 0
      %p232 = por %p230, %p231
      %s234 = sadd.s32 %s233, 1
      %p237 = scmp.eq.s32.totalorder %s26, 1
      %p238 = scmp.ne.s32.totalorder %s233, %s235
      %p239 = scmp.eq.s32.totalorder %s26, 0
      %p240 = por %p238, %p239
      %p241 = scmp.ne.s32.totalorder %s233, %s235
      %p242 = scmp.eq.s32.totalorder %s31, 1
      %p243 = por %p241, %p242
      %p244 = scmp.ne.s32.totalorder %s235, %s236
      %p245 = scmp.eq.s32.totalorder %s31, 0
      %p246 = por %p244, %p245
      %p247 = scmp.ne.s32.totalorder %s235, %s236
      %p248 = scmp.eq.s32.totalorder %s32, 1
      %p249 = por %p247, %p248
      %p251 = scmp.ne.s32.totalorder %s236, %s250
      %p252 = scmp.eq.s32.totalorder %s32, 0
      %p253 = por %p251, %p252
      %s254 = ssub.s32 %s26, %s33
      %p255 = scmp.eq.s32.totalorder %s254, 0
      %s257 = sadd.s32 %s256, 1
      %s258 = scalar_select %p255, %s256, %s257
      %p261 = pneg %p255
      %p262 = scmp.eq.s32.totalorder %s26, 1
      %p263 = por %p261, %p262
      %p264 = scmp.ne.s32.totalorder %s256, %s259
      %p265 = scmp.eq.s32.totalorder %s26, 0
      %p266 = por %p264, %p265
      %p267 = scmp.ne.s32.totalorder %s256, %s259
      %p268 = scmp.eq.s32.totalorder %s31, 1
      %p269 = por %p267, %p268
      %p270 = scmp.ne.s32.totalorder %s259, %s260
      %p271 = scmp.eq.s32.totalorder %s31, 0
      %p272 = por %p270, %p271
      %p273 = scmp.ne.s32.totalorder %s259, %s260
      %p274 = scmp.eq.s32.totalorder %s32, 1
      %p275 = por %p273, %p274
      %p277 = scmp.ne.s32.totalorder %s260, %s276
      %p278 = scmp.eq.s32.totalorder %s32, 0
      %p279 = por %p277, %p278
      %s280 = ssub.s32 %s26, %s33
      %p281 = scmp.eq.s32.totalorder %s280, 0
      %s283 = sadd.s32 %s282, 1
      %s284 = scalar_select %p281, %s282, %s283
      %p287 = pneg %p281
      %p288 = scmp.eq.s32.totalorder %s26, 1
      %p289 = por %p287, %p288
      %p290 = scmp.ne.s32.totalorder %s282, %s285
      %p291 = scmp.eq.s32.totalorder %s26, 0
      %p292 = por %p290, %p291
      %p293 = scmp.ne.s32.totalorder %s282, %s285
      %p294 = scmp.eq.s32.totalorder %s31, 1
      %p295 = por %p293, %p294
      %p296 = scmp.ne.s32.totalorder %s285, %s286
      %p297 = scmp.eq.s32.totalorder %s31, 0
      %p298 = por %p296, %p297
      %p299 = scmp.ne.s32.totalorder %s285, %s286
      %p300 = scmp.eq.s32.totalorder %s32, 1
      %p301 = por %p299, %p300
      %p303 = scmp.ne.s32.totalorder %s286, %s302
      %p304 = scmp.eq.s32.totalorder %s32, 0
      %p305 = por %p303, %p304
      %p306 = scmp.le.s32.totalorder 1, %s26
      %p307 = scmp.lt.s32.totalorder %s26, 3
      %p308 = pnand %p306, %p307
      %p309 = pneg %p308
      // Predicated region
      $region9: #{tpu_custom_call.1} parent=5 // pred_check
        _
      $region10: #{tpu_custom_call.1} parent=5 // pred_check_branch
        %311 = sbr.rel (%p308) target = $region12
      $region11: #{tpu_custom_call.1} parent=5 // pred_region
        %s312 = ssub.s32 %s26, 1
        // Predicated region
        $region13: #{tpu_custom_call.1} parent=11 // pred_check
          %p313 = pneg %p99
        $region14: #{tpu_custom_call.1} parent=11 // pred_check_branch
          %315 = sbr.rel (%p313) target = $region16
        $region15: #{tpu_custom_call.1} parent=11 // pred_region
          %s317 = ssub.s32 1024, 1024
          %318 = vsyncadd [#allocation5], %s317
          %s319 = sshll.u32 [#allocation6], 4
          %s320 = int_to_ptr.vmem [resolvable:$true] %s319
          %325 = dma.hbm_to_vmem [thread:$0]  %s2, 1024, %s320, [#allocation5], 64, 64, 4
        $region16: #{tpu_custom_call.1} parent=11 // pred_fallthru
          _
        // Predicated region
        $region17: #{tpu_custom_call.1} parent=11 // pred_check
          %p326 = pneg %p120
        $region18: #{tpu_custom_call.1} parent=11 // pred_check_branch
          %328 = sbr.rel (%p326) target = $region20
        $region19: #{tpu_custom_call.1} parent=11 // pred_region
          _
        $region20: #{tpu_custom_call.1} parent=11 // pred_fallthru
          _
        // Predicated region
        $region21: #{tpu_custom_call.1} parent=11 // pred_check
          %p329 = pneg %p141
        $region22: #{tpu_custom_call.1} parent=11 // pred_check_branch
          %331 = sbr.rel (%p329) target = $region24
        $region23: #{tpu_custom_call.1} parent=11 // pred_region
          %s333 = ssub.s32 2048, 2048
          %334 = vsyncadd [#allocation8], %s333
          %s335 = sshll.u32 [#allocation7], 4
          %s336 = int_to_ptr.vmem [resolvable:$true] %s335
          %341 = dma.hbm_to_vmem [thread:$0]  %s4, 2048, %s336, [#allocation8], 128, 128, 8
        $region24: #{tpu_custom_call.1} parent=11 // pred_fallthru
          _
        // Predicated region
        $region25: #{tpu_custom_call.1} parent=11 // pred_check
          %p342 = pneg %p162
        $region26: #{tpu_custom_call.1} parent=11 // pred_check_branch
          %344 = sbr.rel (%p342) target = $region28
        $region27: #{tpu_custom_call.1} parent=11 // pred_region
          _
        $region28: #{tpu_custom_call.1} parent=11 // pred_fallthru
          _
        // Predicated region
        $region29: #{tpu_custom_call.1} parent=11 // pred_check
          %p345 = pneg %p183
        $region30: #{tpu_custom_call.1} parent=11 // pred_check_branch
          %347 = sbr.rel (%p345) target = $region32
        $region31: #{tpu_custom_call.1} parent=11 // pred_region
          %s349 = ssub.s32 1024, 1024
          %350 = vsyncadd [#allocation8], %s349
          %s351 = sshll.u32 [#allocation9], 4
          %s352 = int_to_ptr.vmem [resolvable:$true] %s351
          %357 = dma.hbm_to_vmem [thread:$0]  %s6, 1024, %s352, [#allocation8], 64, 64, 4
        $region32: #{tpu_custom_call.1} parent=11 // pred_fallthru
          _
        // Predicated region
        $region33: #{tpu_custom_call.1} parent=11 // pred_check
          %p358 = pneg %p204
        $region34: #{tpu_custom_call.1} parent=11 // pred_check_branch
          %360 = sbr.rel (%p358) target = $region36
        $region35: #{tpu_custom_call.1} parent=11 // pred_region
          _
        $region36: #{tpu_custom_call.1} parent=11 // pred_fallthru
          _
        // Predicated region
        $region37: #{tpu_custom_call.1} parent=11 // pred_check
          %p361 = pneg %p225
        $region38: #{tpu_custom_call.1} parent=11 // pred_check_branch
          %363 = sbr.rel (%p361) target = $region40
        $region39: #{tpu_custom_call.1} parent=11 // pred_region
          %s365 = ssub.s32 2048, 2048
          %366 = vsyncadd [#allocation11], %s365
          %s367 = sshll.u32 [#allocation10], 4
          %s368 = int_to_ptr.vmem [resolvable:$true] %s367
          %373 = dma.hbm_to_vmem [thread:$0]  %s8, 2048, %s368, [#allocation11], 128, 128, 8
        $region40: #{tpu_custom_call.1} parent=11 // pred_fallthru
          _
        // Predicated region
        $region41: #{tpu_custom_call.1} parent=11 // pred_check
          %p374 = pneg %p246
        $region42: #{tpu_custom_call.1} parent=11 // pred_check_branch
          %376 = sbr.rel (%p374) target = $region44
        $region43: #{tpu_custom_call.1} parent=11 // pred_region
          _
        $region44: #{tpu_custom_call.1} parent=11 // pred_fallthru
          _
      $region12: #{tpu_custom_call.1} parent=5 // pred_fallthru
        _
      %p377 = scmp.lt.s32.totalorder %s26, 2
      // Predicated region
      $region45: #{tpu_custom_call.1} parent=5 // pred_check
        %p378 = pneg %p377
      $region46: #{tpu_custom_call.1} parent=5 // pred_check_branch
        %380 = sbr.rel (%p378) target = $region48
      $region47: #{tpu_custom_call.1} parent=5 // pred_region
        // Predicated region
        $region49: #{tpu_custom_call.1} parent=47 // pred_check
          %p381 = pneg %p46
        $region50: #{tpu_custom_call.1} parent=47 // pred_check_branch
          %383 = sbr.rel (%p381) target = $region52
        $region51: #{tpu_custom_call.1} parent=47 // pred_region
          %s384 = sand.u32 %s36, 1
          %s385 = scalar_lea.sflag [#allocation3], %s384
          %s386 = sand.u32 %s36, 1
          %s387 = smul.addr %s386, 64
          %s388 = scalar_lea.vmem [#allocation2], %s387
          %s389 = smul.u32 16, %s26
          %s391 = ssub.s32 1024, 1024
          %392 = vsyncadd %s385, %s391
          %s393 = smul.addr %s389, 64
          %s394 = scalar_lea.hbm %s0, %s393
          %s395 = sshll.u32 %s388, 4
          %s396 = int_to_ptr.vmem [resolvable:$true] %s395
          %401 = dma.hbm_to_vmem [thread:$0]  %s394, 1024, %s396, %s385, 64, 64, 4
        $region52: #{tpu_custom_call.1} parent=47 // pred_fallthru
          _
        // Predicated region
        $region53: #{tpu_custom_call.1} parent=47 // pred_check
          %p402 = pneg %p72
        $region54: #{tpu_custom_call.1} parent=47 // pred_check_branch
          %404 = sbr.rel (%p402) target = $region56
        $region55: #{tpu_custom_call.1} parent=47 // pred_region
          %s405 = sand.u32 %s26, 1
          %s406 = scalar_lea.sflag [#allocation5], %s405
          %s407 = sand.u32 %s62, 1
          %s408 = smul.addr %s407, 64
          %s409 = scalar_lea.vmem [#allocation4], %s408
          %s410 = smul.u32 16, %s26
          %s412 = ssub.s32 1024, 1024
          %413 = vsyncadd %s406, %s412
          %s414 = smul.addr %s410, 64
          %s415 = scalar_lea.hbm %s1, %s414
          %s416 = sshll.u32 %s409, 4
          %s417 = int_to_ptr.vmem [resolvable:$true] %s416
          %422 = dma.hbm_to_vmem [thread:$0]  %s415, 1024, %s417, %s406, 64, 64, 4
        $region56: #{tpu_custom_call.1} parent=47 // pred_fallthru
          _
      $region48: #{tpu_custom_call.1} parent=5 // pred_fallthru
        _
      %p423 = scmp.le.s32.totalorder 1, %s26
      %p424 = scmp.lt.s32.totalorder %s26, 3
      %p425 = pnand %p423, %p424
      %p426 = pneg %p425
      // Predicated region
      $region57: #{tpu_custom_call.1} parent=5 // pred_check
        _
      $region58: #{tpu_custom_call.1} parent=5 // pred_check_branch
        %428 = sbr.rel (%p425) target = $region60
      $region59: #{tpu_custom_call.1} parent=5 // pred_region
        %s429 = ssub.s32 %s26, 1
        %s430 = sand.u32 %s39, 1
        %s431 = scalar_lea.sflag [#allocation3], %s430
        %s432 = sand.u32 %s39, 1
        %s433 = smul.addr %s432, 64
        %s434 = scalar_lea.vmem [#allocation2], %s433
        // Predicated region
        $region61: #{tpu_custom_call.1} parent=59 // pred_check
          %p435 = pneg %p52
        $region62: #{tpu_custom_call.1} parent=59 // pred_check_branch
          %437 = sbr.rel (%p435) target = $region64
        $region63: #{tpu_custom_call.1} parent=59 // pred_region
          %438 = dma.done %s431, 1024
        $region64: #{tpu_custom_call.1} parent=59 // pred_fallthru
          _
        %s439 = sand.u32 %s31, 1
        %s440 = scalar_lea.sflag [#allocation5], %s439
        %s441 = sand.u32 %s65, 1
        %s442 = smul.addr %s441, 64
        %s443 = scalar_lea.vmem [#allocation4], %s442
        // Predicated region
        $region65: #{tpu_custom_call.1} parent=59 // pred_check
          %p444 = pneg %p78
        $region66: #{tpu_custom_call.1} parent=59 // pred_check_branch
          %446 = sbr.rel (%p444) target = $region68
        $region67: #{tpu_custom_call.1} parent=59 // pred_region
          %447 = dma.done %s440, 1024
        $region68: #{tpu_custom_call.1} parent=59 // pred_fallthru
          _
        // Predicated region
        $region69: #{tpu_custom_call.1} parent=59 // pred_check
          %p448 = pneg %p99
        $region70: #{tpu_custom_call.1} parent=59 // pred_check_branch
          %450 = sbr.rel (%p448) target = $region72
        $region71: #{tpu_custom_call.1} parent=59 // pred_region
          %451 = dma.done [#allocation5], 1024
        $region72: #{tpu_custom_call.1} parent=59 // pred_fallthru
          _
        // Predicated region
        $region73: #{tpu_custom_call.1} parent=59 // pred_check
          %p452 = pneg %p141
        $region74: #{tpu_custom_call.1} parent=59 // pred_check_branch
          %454 = sbr.rel (%p452) target = $region76
        $region75: #{tpu_custom_call.1} parent=59 // pred_region
          %455 = dma.done [#allocation8], 2048
        $region76: #{tpu_custom_call.1} parent=59 // pred_fallthru
          _
        // Predicated region
        $region77: #{tpu_custom_call.1} parent=59 // pred_check
          %p456 = pneg %p183
        $region78: #{tpu_custom_call.1} parent=59 // pred_check_branch
          %458 = sbr.rel (%p456) target = $region80
        $region79: #{tpu_custom_call.1} parent=59 // pred_region
          %459 = dma.done [#allocation8], 1024
        $region80: #{tpu_custom_call.1} parent=59 // pred_fallthru
          _
        // Predicated region
        $region81: #{tpu_custom_call.1} parent=59 // pred_check
          %p460 = pneg %p225
        $region82: #{tpu_custom_call.1} parent=59 // pred_check_branch
          %462 = sbr.rel (%p460) target = $region84
        $region83: #{tpu_custom_call.1} parent=59 // pred_region
          %463 = dma.done [#allocation11], 2048
        $region84: #{tpu_custom_call.1} parent=59 // pred_fallthru
          _
        %s464 = sand.u32 %s39, 1
        %s465 = scalar_lea.sflag [#allocation3], %s464
        %s466 = sand.u32 %s39, 1
        %s467 = smul.addr %s466, 64
        %s468 = scalar_lea.vmem [#allocation2], %s467
        %p469 = pneg %p52
        %p470 = pneg %p49
        %s471 = sand.u32 %s31, 1
        %s472 = scalar_lea.sflag [#allocation5], %s471
        %s473 = sand.u32 %s65, 1
        %s474 = smul.addr %s473, 64
        %s475 = scalar_lea.vmem [#allocation4], %s474
        %p476 = pneg %p78
        %p477 = pneg %p75
        %p478 = pneg %p99
        %p479 = pneg %p96
        %p480 = pneg %p120
        %p481 = pneg %p117
        %p482 = pneg %p141
        %p483 = pneg %p138
        %p484 = pneg %p162
        %p485 = pneg %p159
        %p486 = pneg %p183
        %p487 = pneg %p180
        %p488 = pneg %p204
        %p489 = pneg %p201
        %p490 = pneg %p225
        %p491 = pneg %p222
        %p492 = pneg %p246
        %p493 = pneg %p243
        %p494 = pneg %p272
        %p495 = pneg %p269
        %s496 = smul.u32 16, %s31
        %p497 = scmp.lt.s32.totalorder %s496, 31
        %s498 = scalar_select %p497, %s496, 31
        %s499 = smul.addr %s498, 8
        %s500 = scalar_lea.vmem %s10, %s499
        %p501 = pneg %p298
        %p502 = pneg %p295
        %s503 = smul.u32 16, %s31
        %p504 = scmp.lt.s32.totalorder %s503, 31
        %s505 = scalar_select %p504, %s503, 31
        %s506 = smul.addr %s505, 8
        %s507 = scalar_lea.vmem %s11, %s506
        %s508 = smul.u32 16, %s31
        %s509 = smul.u32 16, %s31
        %s510 = smul.u32 16, %s31
        %p511 = scmp.lt.s32.totalorder %s510, 31
        %s512 = scalar_select %p511, %s510, 31
        %s513 = smul.addr %s512, 8
        %s514 = scalar_lea.vmem %s10, %s513
        %s515 = smul.u32 16, %s31
        %s516 = smul.u32 16, %s31
        %p517 = scmp.lt.s32.totalorder %s516, 31
        %s518 = scalar_select %p517, %s516, 31
        %s519 = smul.addr %s518, 8
        %s520 = scalar_lea.vmem %s11, %s519
        %s521 = smul.u32 16, %s31
        %v523 = vld [vmem:[%s434] sm:$0xf]
        %v524 = vld [vmem:[%s434 + $0x4] sm:$0xf]
        %v525 = vld [vmem:[%s434 + $0x8] sm:$0xf]
        %v526 = vld [vmem:[%s434 + $0xc] sm:$0xf]
        %v527 = vld [vmem:[%s434 + $0x10] sm:$0xf]
        %v528 = vld [vmem:[%s434 + $0x14] sm:$0xf]
        %v529 = vld [vmem:[%s434 + $0x18] sm:$0xf]
        %v530 = vld [vmem:[%s434 + $0x1c] sm:$0xf]
        %v531 = vld [vmem:[%s434 + $0x20] sm:$0xf]
        %v532 = vld [vmem:[%s434 + $0x24] sm:$0xf]
        %v533 = vld [vmem:[%s434 + $0x28] sm:$0xf]
        %v534 = vld [vmem:[%s434 + $0x2c] sm:$0xf]
        %v535 = vld [vmem:[%s434 + $0x30] sm:$0xf]
        %v536 = vld [vmem:[%s434 + $0x34] sm:$0xf]
        %v537 = vld [vmem:[%s434 + $0x38] sm:$0xf]
        %v538 = vld [vmem:[%s434 + $0x3c] sm:$0xf]
        %v539 = vunpack.c.l.bf16 %v523
        %v540 = vunpack.c.l.bf16 %v524
        %v541 = vunpack.c.l.bf16 %v525
        %v542 = vunpack.c.l.bf16 %v526
        %v543 = vunpack.c.l.bf16 %v527
        %v544 = vunpack.c.l.bf16 %v528
        %v545 = vunpack.c.l.bf16 %v529
        %v546 = vunpack.c.l.bf16 %v530
        %v547 = vunpack.c.l.bf16 %v531
        %v548 = vunpack.c.l.bf16 %v532
        %v549 = vunpack.c.l.bf16 %v533
        %v550 = vunpack.c.l.bf16 %v534
        %v551 = vunpack.c.l.bf16 %v535
        %v552 = vunpack.c.l.bf16 %v536
        %v553 = vunpack.c.l.bf16 %v537
        %v554 = vunpack.c.l.bf16 %v538
        %v555 = vld [vmem:[#allocation6] sm:$0xf]
        %v556 = vld [vmem:[#allocation6 + $0x4] sm:$0xf]
        %v557 = vld [vmem:[#allocation6 + $0x8] sm:$0xf]
        %v558 = vld [vmem:[#allocation6 + $0xc] sm:$0xf]
        %v559 = vld [vmem:[#allocation6 + $0x10] sm:$0xf]
        %v560 = vld [vmem:[#allocation6 + $0x14] sm:$0xf]
        %v561 = vld [vmem:[#allocation6 + $0x18] sm:$0xf]
        %v562 = vld [vmem:[#allocation6 + $0x1c] sm:$0xf]
        %v563 = vld [vmem:[#allocation6 + $0x20] sm:$0xf]
        %v564 = vld [vmem:[#allocation6 + $0x24] sm:$0xf]
        %v565 = vld [vmem:[#allocation6 + $0x28] sm:$0xf]
        %v566 = vld [vmem:[#allocation6 + $0x2c] sm:$0xf]
        %v567 = vld [vmem:[#allocation6 + $0x30] sm:$0xf]
        %v568 = vld [vmem:[#allocation6 + $0x34] sm:$0xf]
        %v569 = vld [vmem:[#allocation6 + $0x38] sm:$0xf]
        %v570 = vld [vmem:[#allocation6 + $0x3c] sm:$0xf]
        %v571 = vld [vmem:[%s3] sm:$0x1]
        %v573 = vlaneseq
        %v574 = vshrl.u32 %v573, 7
        %v575 = vsub.s32 0, %v574
        %v576 = vrot.slane %v571, %v575
        %v594 = vunpack.c.l.b16 %v523
        %v595 = vunpack.c.l.b16 %v524
        %v596 = vunpack.c.l.b16 %v525
        %v597 = vunpack.c.l.b16 %v526
        %v598 = vunpack.c.l.b16 %v527
        %v599 = vunpack.c.l.b16 %v528
        %v600 = vunpack.c.l.b16 %v529
        %v601 = vunpack.c.l.b16 %v530
        %v602 = vunpack.c.l.b16 %v531
        %v603 = vunpack.c.l.b16 %v532
        %v604 = vunpack.c.l.b16 %v533
        %v605 = vunpack.c.l.b16 %v534
        %v606 = vunpack.c.l.b16 %v535
        %v607 = vunpack.c.l.b16 %v536
        %v608 = vunpack.c.l.b16 %v537
        %v609 = vunpack.c.l.b16 %v538
        %v610 = vpack.c.b16 %v595, %v594
        %v611 = vpack.c.b16 %v597, %v596
        %v612 = vpack.c.b16 %v599, %v598
        %v613 = vpack.c.b16 %v601, %v600
        %v614 = vpack.c.b16 %v603, %v602
        %v615 = vpack.c.b16 %v605, %v604
        %v616 = vpack.c.b16 %v607, %v606
        %v617 = vpack.c.b16 %v609, %v608
        %v642 = vunpack.c.l.b16 %v555
        %v643 = vunpack.c.l.b16 %v556
        %v644 = vunpack.c.l.b16 %v557
        %v645 = vunpack.c.l.b16 %v558
        %v646 = vunpack.c.l.b16 %v559
        %v647 = vunpack.c.l.b16 %v560
        %v648 = vunpack.c.l.b16 %v561
        %v649 = vunpack.c.l.b16 %v562
        %v650 = vunpack.c.l.b16 %v563
        %v651 = vunpack.c.l.b16 %v564
        %v652 = vunpack.c.l.b16 %v565
        %v653 = vunpack.c.l.b16 %v566
        %v654 = vunpack.c.l.b16 %v567
        %v655 = vunpack.c.l.b16 %v568
        %v656 = vunpack.c.l.b16 %v569
        %v657 = vunpack.c.l.b16 %v570
        %v658 = vpack.c.b16 %v643, %v642
        %v659 = vpack.c.b16 %v645, %v644
        %v660 = vpack.c.b16 %v647, %v646
        %v661 = vpack.c.b16 %v649, %v648
        %v662 = vpack.c.b16 %v651, %v650
        %v663 = vpack.c.b16 %v653, %v652
        %v664 = vpack.c.b16 %v655, %v654
        %v665 = vpack.c.b16 %v657, %v656
        %674 = vmatprep.subr.bf16.mxu0 0
        %675 = vmatpush1.bf16.msra.mxu0 %v658
        %676 = vmatprep.subr.bf16.mxu0 0
        %677 = vmatpush1.bf16.msra.mxu0 %v659
        %678 = vmatprep.subr.bf16.mxu0 0
        %679 = vmatpush1.bf16.msra.mxu0 %v660
        %680 = vmatprep.subr.bf16.mxu0 0
        %681 = vmatpush1.bf16.msra.mxu0 %v661
        %682 = vmatprep.subr.bf16.mxu0 0
        %683 = vmatpush1.bf16.msra.mxu0 %v662
        %684 = vmatprep.subr.bf16.mxu0 0
        %685 = vmatpush1.bf16.msra.mxu0 %v663
        %686 = vmatprep.subr.bf16.mxu0 0
        %687 = vmatpush1.bf16.msra.mxu0 %v664
        %688 = vmatprep.subr.bf16.mxu0 0
        %689 = vmatpush1.bf16.msra.mxu0 %v665
        %690 = vmatprep.subr.bf16.mxu0 0
        %691 = vmatpush1.bf16.msra.mxu0 0
        %692 = vmatprep.subr.bf16.mxu0 0
        %693 = vmatpush1.bf16.msra.mxu0 0
        %694 = vmatprep.subr.bf16.mxu0 0
        %695 = vmatpush1.bf16.msra.mxu0 0
        %696 = vmatprep.subr.bf16.mxu0 0
        %697 = vmatpush1.bf16.msra.mxu0 0
        %698 = vmatprep.subr.bf16.mxu0 0
        %699 = vmatpush1.bf16.msra.mxu0 0
        %700 = vmatprep.subr.bf16.mxu0 0
        %701 = vmatpush1.bf16.msra.mxu0 0
        %702 = vmatprep.subr.bf16.mxu0 0
        %703 = vmatpush1.bf16.msra.mxu0 0
        %704 = vmatprep.subr.bf16.mxu0 0
        %705 = vmatpush1.bf16.msra.mxu0 0
        %706 = vmatprep.mubr.bf16.mxu0 0
        %707 = vmatmul.mubr.bf16.gmra.mrb[0].mxu0 %v610
        %v708 = vpop.f32.mrb[0].mxu0
        %v709 = vadd.f32 %v576, %v708
        %v710 = vpop.f32.mrb[0].mxu0
        %v711 = vpop.f32.mrb[0].mxu0
        %v712 = vadd.f32 %v576, %v711
        %v713 = vpop.f32.mrb[0].mxu0
        %714 = vmatprep.mubr.bf16.mxu0 0
        %715 = vmatmul.mubr.bf16.gmra.mrb[0].mxu0 %v611
        %v716 = vpop.f32.mrb[0].mxu0
        %v717 = vadd.f32 %v576, %v716
        %v718 = vpop.f32.mrb[0].mxu0
        %v719 = vpop.f32.mrb[0].mxu0
        %v720 = vadd.f32 %v576, %v719
        %v721 = vpop.f32.mrb[0].mxu0
        %722 = vmatprep.mubr.bf16.mxu0 0
        %723 = vmatmul.mubr.bf16.gmra.mrb[0].mxu0 %v612
        %v724 = vpop.f32.mrb[0].mxu0
        %v725 = vadd.f32 %v576, %v724
        %v726 = vpop.f32.mrb[0].mxu0
        %v727 = vpop.f32.mrb[0].mxu0
        %v728 = vadd.f32 %v576, %v727
        %v729 = vpop.f32.mrb[0].mxu0
        %730 = vmatprep.mubr.bf16.mxu0 0
        %731 = vmatmul.mubr.bf16.gmra.mrb[0].mxu0 %v613
        %v732 = vpop.f32.mrb[0].mxu0
        %v733 = vadd.f32 %v576, %v732
        %v734 = vpop.f32.mrb[0].mxu0
        %v735 = vpop.f32.mrb[0].mxu0
        %v736 = vadd.f32 %v576, %v735
        %v737 = vpop.f32.mrb[0].mxu0
        %738 = vmatprep.mubr.bf16.mxu0 0
        %739 = vmatmul.mubr.bf16.gmra.mrb[0].mxu0 %v614
        %v740 = vpop.f32.mrb[0].mxu0
        %v741 = vadd.f32 %v576, %v740
        %v742 = vpop.f32.mrb[0].mxu0
        %v743 = vpop.f32.mrb[0].mxu0
        %v744 = vadd.f32 %v576, %v743
        %v745 = vpop.f32.mrb[0].mxu0
        %746 = vmatprep.mubr.bf16.mxu0 0
        %747 = vmatmul.mubr.bf16.gmra.mrb[0].mxu0 %v615
        %v748 = vpop.f32.mrb[0].mxu0
        %v749 = vadd.f32 %v576, %v748
        %v750 = vpop.f32.mrb[0].mxu0
        %v751 = vpop.f32.mrb[0].mxu0
        %v752 = vadd.f32 %v576, %v751
        %v753 = vpop.f32.mrb[0].mxu0
        %754 = vmatprep.mubr.bf16.mxu0 0
        %755 = vmatmul.mubr.bf16.gmra.mrb[0].mxu0 %v616
        %v756 = vpop.f32.mrb[0].mxu0
        %v757 = vadd.f32 %v576, %v756
        %v758 = vpop.f32.mrb[0].mxu0
        %v759 = vpop.f32.mrb[0].mxu0
        %v760 = vadd.f32 %v576, %v759
        %v761 = vpop.f32.mrb[0].mxu0
        %762 = vmatprep.mubr.bf16.mxu0 0
        %763 = vmatmul.mubr.bf16.gmra.mrb[0].mxu0 %v617
        %v764 = vpop.f32.mrb[0].mxu0
        %v765 = vadd.f32 %v576, %v764
        %v766 = vpop.f32.mrb[0].mxu0
        %v767 = vpop.f32.mrb[0].mxu0
        %v768 = vadd.f32 %v576, %v767
        %v769 = vpop.f32.mrb[0].mxu0
        %770 = vdwg.mxu0
        %v771 = vmul.f32 %v709, 0.01
        %v772 = vmul.f32 %v712, 0.01
        %v773 = vmul.f32 %v717, 0.01
        %v774 = vmul.f32 %v720, 0.01
        %v775 = vmul.f32 %v725, 0.01
        %v776 = vmul.f32 %v728, 0.01
        %v777 = vmul.f32 %v733, 0.01
        %v778 = vmul.f32 %v736, 0.01
        %v779 = vmul.f32 %v741, 0.01
        %v780 = vmul.f32 %v744, 0.01
        %v781 = vmul.f32 %v749, 0.01
        %v782 = vmul.f32 %v752, 0.01
        %v783 = vmul.f32 %v757, 0.01
        %v784 = vmul.f32 %v760, 0.01
        %v785 = vmul.f32 %v765, 0.01
        %v786 = vmul.f32 %v768, 0.01
        %v787 = vmax.f32 %v709, %v771
        %v788 = vmax.f32 %v712, %v772
        %v789 = vmax.f32 %v717, %v773
        %v790 = vmax.f32 %v720, %v774
        %v791 = vmax.f32 %v725, %v775
        %v792 = vmax.f32 %v728, %v776
        %v793 = vmax.f32 %v733, %v777
        %v794 = vmax.f32 %v736, %v778
        %v795 = vmax.f32 %v741, %v779
        %v796 = vmax.f32 %v744, %v780
        %v797 = vmax.f32 %v749, %v781
        %v798 = vmax.f32 %v752, %v782
        %v799 = vmax.f32 %v757, %v783
        %v800 = vmax.f32 %v760, %v784
        %v801 = vmax.f32 %v765, %v785
        %v802 = vmax.f32 %v768, %v786
        %v803 = vpack.c.bf16 %v788, %v787
        %v804 = vpack.c.bf16 %v790, %v789
        %v805 = vpack.c.bf16 %v792, %v791
        %v806 = vpack.c.bf16 %v794, %v793
        %v807 = vpack.c.bf16 %v796, %v795
        %v808 = vpack.c.bf16 %v798, %v797
        %v809 = vpack.c.bf16 %v800, %v799
        %v810 = vpack.c.bf16 %v802, %v801
        %v811 = vld [vmem:[#allocation7] sm:$0xff]
        %v812 = vld [vmem:[#allocation7 + $0x8] sm:$0xff]
        %v813 = vld [vmem:[#allocation7 + $0x10] sm:$0xff]
        %v814 = vld [vmem:[#allocation7 + $0x18] sm:$0xff]
        %v815 = vld [vmem:[#allocation7 + $0x20] sm:$0xff]
        %v816 = vld [vmem:[#allocation7 + $0x28] sm:$0xff]
        %v817 = vld [vmem:[#allocation7 + $0x30] sm:$0xff]
        %v818 = vld [vmem:[#allocation7 + $0x38] sm:$0xff]
        %v819 = vld [vmem:[#allocation7 + $0x40] sm:$0xff]
        %v820 = vld [vmem:[#allocation7 + $0x48] sm:$0xff]
        %v821 = vld [vmem:[#allocation7 + $0x50] sm:$0xff]
        %v822 = vld [vmem:[#allocation7 + $0x58] sm:$0xff]
        %v823 = vld [vmem:[#allocation7 + $0x60] sm:$0xff]
        %v824 = vld [vmem:[#allocation7 + $0x68] sm:$0xff]
        %v825 = vld [vmem:[#allocation7 + $0x70] sm:$0xff]
        %v826 = vld [vmem:[#allocation7 + $0x78] sm:$0xff]
        %v827 = vld [vmem:[%s5] sm:$0x3]
        %v829 = vlaneseq
        %v830 = vshrl.u32 %v829, 7
        %v831 = vsub.s32 0, %v830
        %v832 = vrot.slane %v827, %v831
        %v833 = vlaneseq
        %v834 = vshrl.u32 %v833, 7
        %v835 = vsub.s32 1, %v834
        %v836 = vrot.slane %v827, %v835
        %v855 = vunpack.c.l.b16 %v811
        %v856 = vunpack.c.h.b16 %v811
        %v857 = vunpack.c.l.b16 %v812
        %v858 = vunpack.c.h.b16 %v812
        %v859 = vunpack.c.l.b16 %v813
        %v860 = vunpack.c.h.b16 %v813
        %v861 = vunpack.c.l.b16 %v814
        %v862 = vunpack.c.h.b16 %v814
        %v863 = vunpack.c.l.b16 %v815
        %v864 = vunpack.c.h.b16 %v815
        %v865 = vunpack.c.l.b16 %v816
        %v866 = vunpack.c.h.b16 %v816
        %v867 = vunpack.c.l.b16 %v817
        %v868 = vunpack.c.h.b16 %v817
        %v869 = vunpack.c.l.b16 %v818
        %v870 = vunpack.c.h.b16 %v818
        %v871 = vunpack.c.l.b16 %v819
        %v872 = vunpack.c.h.b16 %v819
        %v873 = vunpack.c.l.b16 %v820
        %v874 = vunpack.c.h.b16 %v820
        %v875 = vunpack.c.l.b16 %v821
        %v876 = vunpack.c.h.b16 %v821
        %v877 = vunpack.c.l.b16 %v822
        %v878 = vunpack.c.h.b16 %v822
        %v879 = vunpack.c.l.b16 %v823
        %v880 = vunpack.c.h.b16 %v823
        %v881 = vunpack.c.l.b16 %v824
        %v882 = vunpack.c.h.b16 %v824
        %v883 = vunpack.c.l.b16 %v825
        %v884 = vunpack.c.h.b16 %v825
        %v885 = vunpack.c.l.b16 %v826
        %v886 = vunpack.c.h.b16 %v826
        %v887 = vpack.c.b16 %v857, %v855
        %v888 = vpack.c.b16 %v858, %v856
        %v889 = vpack.c.b16 %v861, %v859
        %v890 = vpack.c.b16 %v862, %v860
        %v891 = vpack.c.b16 %v865, %v863
        %v892 = vpack.c.b16 %v866, %v864
        %v893 = vpack.c.b16 %v869, %v867
        %v894 = vpack.c.b16 %v870, %v868
        %v895 = vpack.c.b16 %v873, %v871
        %v896 = vpack.c.b16 %v874, %v872
        %v897 = vpack.c.b16 %v877, %v875
        %v898 = vpack.c.b16 %v878, %v876
        %v899 = vpack.c.b16 %v881, %v879
        %v900 = vpack.c.b16 %v882, %v880
        %v901 = vpack.c.b16 %v885, %v883
        %v902 = vpack.c.b16 %v886, %v884
        %919 = vmatprep.subr.bf16.mxu0 %v888
        %920 = vmatpush1.bf16.msra.mxu0 %v887
        %921 = vmatprep.subr.bf16.mxu0 %v890
        %922 = vmatpush1.bf16.msra.mxu0 %v889
        %923 = vmatprep.subr.bf16.mxu0 %v892
        %924 = vmatpush1.bf16.msra.mxu0 %v891
        %925 = vmatprep.subr.bf16.mxu0 %v894
        %926 = vmatpush1.bf16.msra.mxu0 %v893
        %927 = vmatprep.subr.bf16.mxu0 %v896
        %928 = vmatpush1.bf16.msra.mxu0 %v895
        %929 = vmatprep.subr.bf16.mxu0 %v898
        %930 = vmatpush1.bf16.msra.mxu0 %v897
        %931 = vmatprep.subr.bf16.mxu0 %v900
        %932 = vmatpush1.bf16.msra.mxu0 %v899
        %933 = vmatprep.subr.bf16.mxu0 %v902
        %934 = vmatpush1.bf16.msra.mxu0 %v901
        %935 = vmatprep.subr.bf16.mxu0 0
        %936 = vmatpush1.bf16.msra.mxu0 0
        %937 = vmatprep.subr.bf16.mxu0 0
        %938 = vmatpush1.bf16.msra.mxu0 0
        %939 = vmatprep.subr.bf16.mxu0 0
        %940 = vmatpush1.bf16.msra.mxu0 0
        %941 = vmatprep.subr.bf16.mxu0 0
        %942 = vmatpush1.bf16.msra.mxu0 0
        %943 = vmatprep.subr.bf16.mxu0 0
        %944 = vmatpush1.bf16.msra.mxu0 0
        %945 = vmatprep.subr.bf16.mxu0 0
        %946 = vmatpush1.bf16.msra.mxu0 0
        %947 = vmatprep.subr.bf16.mxu0 0
        %948 = vmatpush1.bf16.msra.mxu0 0
        %949 = vmatprep.subr.bf16.mxu0 0
        %950 = vmatpush1.bf16.msra.mxu0 0
        %951 = vmatprep.mubr.bf16.mxu0 0
        %952 = vmatmul.mubr.bf16.gmra.mrb[0].mxu0 %v803
        %v953 = vpop.f32.mrb[0].mxu0
        %v954 = vadd.f32 %v832, %v953
        %v955 = vpop.f32.mrb[0].mxu0
        %v956 = vadd.f32 %v836, %v955
        %v957 = vpop.f32.mrb[0].mxu0
        %v958 = vadd.f32 %v832, %v957
        %v959 = vpop.f32.mrb[0].mxu0
        %v960 = vadd.f32 %v836, %v959
        %961 = vmatprep.mubr.bf16.mxu0 0
        %962 = vmatmul.mubr.bf16.gmra.mrb[0].mxu0 %v804
        %v963 = vpop.f32.mrb[0].mxu0
        %v964 = vadd.f32 %v832, %v963
        %v965 = vpop.f32.mrb[0].mxu0
        %v966 = vadd.f32 %v836, %v965
        %v967 = vpop.f32.mrb[0].mxu0
        %v968 = vadd.f32 %v832, %v967
        %v969 = vpop.f32.mrb[0].mxu0
        %v970 = vadd.f32 %v836, %v969
        %971 = vmatprep.mubr.bf16.mxu0 0
        %972 = vmatmul.mubr.bf16.gmra.mrb[0].mxu0 %v805
        %v973 = vpop.f32.mrb[0].mxu0
        %v974 = vadd.f32 %v832, %v973
        %v975 = vpop.f32.mrb[0].mxu0
        %v976 = vadd.f32 %v836, %v975
        %v977 = vpop.f32.mrb[0].mxu0
        %v978 = vadd.f32 %v832, %v977
        %v979 = vpop.f32.mrb[0].mxu0
        %v980 = vadd.f32 %v836, %v979
        %981 = vmatprep.mubr.bf16.mxu0 0
        %982 = vmatmul.mubr.bf16.gmra.mrb[0].mxu0 %v806
        %v983 = vpop.f32.mrb[0].mxu0
        %v984 = vadd.f32 %v832, %v983
        %v985 = vpop.f32.mrb[0].mxu0
        %v986 = vadd.f32 %v836, %v985
        %v987 = vpop.f32.mrb[0].mxu0
        %v988 = vadd.f32 %v832, %v987
        %v989 = vpop.f32.mrb[0].mxu0
        %v990 = vadd.f32 %v836, %v989
        %991 = vmatprep.mubr.bf16.mxu0 0
        %992 = vmatmul.mubr.bf16.gmra.mrb[0].mxu0 %v807
        %v993 = vpop.f32.mrb[0].mxu0
        %v994 = vadd.f32 %v832, %v993
        %v995 = vpop.f32.mrb[0].mxu0
        %v996 = vadd.f32 %v836, %v995
        %v997 = vpop.f32.mrb[0].mxu0
        %v998 = vadd.f32 %v832, %v997
        %v999 = vpop.f32.mrb[0].mxu0
        %v1000 = vadd.f32 %v836, %v999
        %1001 = vmatprep.mubr.bf16.mxu0 0
        %1002 = vmatmul.mubr.bf16.gmra.mrb[0].mxu0 %v808
        %v1003 = vpop.f32.mrb[0].mxu0
        %v1004 = vadd.f32 %v832, %v1003
        %v1005 = vpop.f32.mrb[0].mxu0
        %v1006 = vadd.f32 %v836, %v1005
        %v1007 = vpop.f32.mrb[0].mxu0
        %v1008 = vadd.f32 %v832, %v1007
        %v1009 = vpop.f32.mrb[0].mxu0
        %v1010 = vadd.f32 %v836, %v1009
        %1011 = vmatprep.mubr.bf16.mxu0 0
        %1012 = vmatmul.mubr.bf16.gmra.mrb[0].mxu0 %v809
        %v1013 = vpop.f32.mrb[0].mxu0
        %v1014 = vadd.f32 %v832, %v1013
        %v1015 = vpop.f32.mrb[0].mxu0
        %v1016 = vadd.f32 %v836, %v1015
        %v1017 = vpop.f32.mrb[0].mxu0
        %v1018 = vadd.f32 %v832, %v1017
        %v1019 = vpop.f32.mrb[0].mxu0
        %v1020 = vadd.f32 %v836, %v1019
        %1021 = vmatprep.mubr.bf16.mxu0 0
        %1022 = vmatmul.mubr.bf16.gmra.mrb[0].mxu0 %v810
        %v1023 = vpop.f32.mrb[0].mxu0
        %v1024 = vadd.f32 %v832, %v1023
        %v1025 = vpop.f32.mrb[0].mxu0
        %v1026 = vadd.f32 %v836, %v1025
        %v1027 = vpop.f32.mrb[0].mxu0
        %v1028 = vadd.f32 %v832, %v1027
        %v1029 = vpop.f32.mrb[0].mxu0
        %v1030 = vadd.f32 %v836, %v1029
        %1031 = vdwg.mxu0
        %v1032 = vmul.f32 %v956, 0.5
        %v1033 = vmul.f32 %v960, 0.5
        %v1034 = vmul.f32 %v966, 0.5
        %v1035 = vmul.f32 %v970, 0.5
        %v1036 = vmul.f32 %v976, 0.5
        %v1037 = vmul.f32 %v980, 0.5
        %v1038 = vmul.f32 %v986, 0.5
        %v1039 = vmul.f32 %v990, 0.5
        %v1040 = vmul.f32 %v996, 0.5
        %v1041 = vmul.f32 %v1000, 0.5
        %v1042 = vmul.f32 %v1006, 0.5
        %v1043 = vmul.f32 %v1010, 0.5
        %v1044 = vmul.f32 %v1016, 0.5
        %v1045 = vmul.f32 %v1020, 0.5
        %v1046 = vmul.f32 %v1026, 0.5
        %v1047 = vmul.f32 %v1030, 0.5
        %v1048 = vmul.f32 %v1032, 1.442695
        %v1049 = vpow.pop %v1048
        %v1050 = vmul.f32 %v1033, 1.442695
        %v1051 = vpow.pop %v1050
        %v1052 = vmul.f32 %v1034, 1.442695
        %v1053 = vpow.pop %v1052
        %v1054 = vmul.f32 %v1035, 1.442695
        %v1055 = vpow.pop %v1054
        %v1056 = vmul.f32 %v1036, 1.442695
        %v1057 = vpow.pop %v1056
        %v1058 = vmul.f32 %v1037, 1.442695
        %v1059 = vpow.pop %v1058
        %v1060 = vmul.f32 %v1038, 1.442695
        %v1061 = vpow.pop %v1060
        %v1062 = vmul.f32 %v1039, 1.442695
        %v1063 = vpow.pop %v1062
        %v1064 = vmul.f32 %v1040, 1.442695
        %v1065 = vpow.pop %v1064
        %v1066 = vmul.f32 %v1041, 1.442695
        %v1067 = vpow.pop %v1066
        %v1068 = vmul.f32 %v1042, 1.442695
        %v1069 = vpow.pop %v1068
        %v1070 = vmul.f32 %v1043, 1.442695
        %v1071 = vpow.pop %v1070
        %v1072 = vmul.f32 %v1044, 1.442695
        %v1073 = vpow.pop %v1072
        %v1074 = vmul.f32 %v1045, 1.442695
        %v1075 = vpow.pop %v1074
        %v1076 = vmul.f32 %v1046, 1.442695
        %v1077 = vpow.pop %v1076
        %v1078 = vmul.f32 %v1047, 1.442695
        %v1079 = vpow.pop %v1078
        %v1080 = vld [vmem:[%s443] sm:$0xf]
        %v1081 = vld [vmem:[%s443 + $0x4] sm:$0xf]
        %v1082 = vld [vmem:[%s443 + $0x8] sm:$0xf]
        %v1083 = vld [vmem:[%s443 + $0xc] sm:$0xf]
        %v1084 = vld [vmem:[%s443 + $0x10] sm:$0xf]
        %v1085 = vld [vmem:[%s443 + $0x14] sm:$0xf]
        %v1086 = vld [vmem:[%s443 + $0x18] sm:$0xf]
        %v1087 = vld [vmem:[%s443 + $0x1c] sm:$0xf]
        %v1088 = vld [vmem:[%s443 + $0x20] sm:$0xf]
        %v1089 = vld [vmem:[%s443 + $0x24] sm:$0xf]
        %v1090 = vld [vmem:[%s443 + $0x28] sm:$0xf]
        %v1091 = vld [vmem:[%s443 + $0x2c] sm:$0xf]
        %v1092 = vld [vmem:[%s443 + $0x30] sm:$0xf]
        %v1093 = vld [vmem:[%s443 + $0x34] sm:$0xf]
        %v1094 = vld [vmem:[%s443 + $0x38] sm:$0xf]
        %v1095 = vld [vmem:[%s443 + $0x3c] sm:$0xf]
        %v1096 = vunpack.c.l.bf16 %v1080
        %v1097 = vunpack.c.l.bf16 %v1081
        %v1098 = vunpack.c.l.bf16 %v1082
        %v1099 = vunpack.c.l.bf16 %v1083
        %v1100 = vunpack.c.l.bf16 %v1084
        %v1101 = vunpack.c.l.bf16 %v1085
        %v1102 = vunpack.c.l.bf16 %v1086
        %v1103 = vunpack.c.l.bf16 %v1087
        %v1104 = vunpack.c.l.bf16 %v1088
        %v1105 = vunpack.c.l.bf16 %v1089
        %v1106 = vunpack.c.l.bf16 %v1090
        %v1107 = vunpack.c.l.bf16 %v1091
        %v1108 = vunpack.c.l.bf16 %v1092
        %v1109 = vunpack.c.l.bf16 %v1093
        %v1110 = vunpack.c.l.bf16 %v1094
        %v1111 = vunpack.c.l.bf16 %v1095
        %v1112 = vmul.f32 %v1096, %v1049
        %v1113 = vmul.f32 %v1097, %v1051
        %v1114 = vmul.f32 %v1098, %v1053
        %v1115 = vmul.f32 %v1099, %v1055
        %v1116 = vmul.f32 %v1100, %v1057
        %v1117 = vmul.f32 %v1101, %v1059
        %v1118 = vmul.f32 %v1102, %v1061
        %v1119 = vmul.f32 %v1103, %v1063
        %v1120 = vmul.f32 %v1104, %v1065
        %v1121 = vmul.f32 %v1105, %v1067
        %v1122 = vmul.f32 %v1106, %v1069
        %v1123 = vmul.f32 %v1107, %v1071
        %v1124 = vmul.f32 %v1108, %v1073
        %v1125 = vmul.f32 %v1109, %v1075
        %v1126 = vmul.f32 %v1110, %v1077
        %v1127 = vmul.f32 %v1111, %v1079
        %v1128 = vadd.f32 %v954, %v1112
        %v1129 = vadd.f32 %v958, %v1113
        %v1130 = vadd.f32 %v964, %v1114
        %v1131 = vadd.f32 %v968, %v1115
        %v1132 = vadd.f32 %v974, %v1116
        %v1133 = vadd.f32 %v978, %v1117
        %v1134 = vadd.f32 %v984, %v1118
        %v1135 = vadd.f32 %v988, %v1119
        %v1136 = vadd.f32 %v994, %v1120
        %v1137 = vadd.f32 %v998, %v1121
        %v1138 = vadd.f32 %v1004, %v1122
        %v1139 = vadd.f32 %v1008, %v1123
        %v1140 = vadd.f32 %v1014, %v1124
        %v1141 = vadd.f32 %v1018, %v1125
        %v1142 = vadd.f32 %v1024, %v1126
        %v1143 = vadd.f32 %v1028, %v1127
        %v1144 = vpack.c.bf16 %v1129, %v1128
        %v1145 = vpack.c.bf16 %v1131, %v1130
        %v1146 = vpack.c.bf16 %v1133, %v1132
        %v1147 = vpack.c.bf16 %v1135, %v1134
        %v1148 = vpack.c.bf16 %v1137, %v1136
        %v1149 = vpack.c.bf16 %v1139, %v1138
        %v1150 = vpack.c.bf16 %v1141, %v1140
        %v1151 = vpack.c.bf16 %v1143, %v1142
        %v1152 = vld [vmem:[#allocation9] sm:$0xf]
        %v1153 = vld [vmem:[#allocation9 + $0x4] sm:$0xf]
        %v1154 = vld [vmem:[#allocation9 + $0x8] sm:$0xf]
        %v1155 = vld [vmem:[#allocation9 + $0xc] sm:$0xf]
        %v1156 = vld [vmem:[#allocation9 + $0x10] sm:$0xf]
        %v1157 = vld [vmem:[#allocation9 + $0x14] sm:$0xf]
        %v1158 = vld [vmem:[#allocation9 + $0x18] sm:$0xf]
        %v1159 = vld [vmem:[#allocation9 + $0x1c] sm:$0xf]
        %v1160 = vld [vmem:[#allocation9 + $0x20] sm:$0xf]
        %v1161 = vld [vmem:[#allocation9 + $0x24] sm:$0xf]
        %v1162 = vld [vmem:[#allocation9 + $0x28] sm:$0xf]
        %v1163 = vld [vmem:[#allocation9 + $0x2c] sm:$0xf]
        %v1164 = vld [vmem:[#allocation9 + $0x30] sm:$0xf]
        %v1165 = vld [vmem:[#allocation9 + $0x34] sm:$0xf]
        %v1166 = vld [vmem:[#allocation9 + $0x38] sm:$0xf]
        %v1167 = vld [vmem:[#allocation9 + $0x3c] sm:$0xf]
        %v1168 = vld [vmem:[%s7] sm:$0x1]
        %v1170 = vlaneseq
        %v1171 = vshrl.u32 %v1170, 7
        %v1172 = vsub.s32 0, %v1171
        %v1173 = vrot.slane %v1168, %v1172
        %v1191 = vunpack.c.l.b16 %v1152
        %v1192 = vunpack.c.l.b16 %v1153
        %v1193 = vunpack.c.l.b16 %v1154
        %v1194 = vunpack.c.l.b16 %v1155
        %v1195 = vunpack.c.l.b16 %v1156
        %v1196 = vunpack.c.l.b16 %v1157
        %v1197 = vunpack.c.l.b16 %v1158
        %v1198 = vunpack.c.l.b16 %v1159
        %v1199 = vunpack.c.l.b16 %v1160
        %v1200 = vunpack.c.l.b16 %v1161
        %v1201 = vunpack.c.l.b16 %v1162
        %v1202 = vunpack.c.l.b16 %v1163
        %v1203 = vunpack.c.l.b16 %v1164
        %v1204 = vunpack.c.l.b16 %v1165
        %v1205 = vunpack.c.l.b16 %v1166
        %v1206 = vunpack.c.l.b16 %v1167
        %v1207 = vpack.c.b16 %v1192, %v1191
        %v1208 = vpack.c.b16 %v1194, %v1193
        %v1209 = vpack.c.b16 %v1196, %v1195
        %v1210 = vpack.c.b16 %v1198, %v1197
        %v1211 = vpack.c.b16 %v1200, %v1199
        %v1212 = vpack.c.b16 %v1202, %v1201
        %v1213 = vpack.c.b16 %v1204, %v1203
        %v1214 = vpack.c.b16 %v1206, %v1205
        %1223 = vmatprep.subr.bf16.mxu0 0
        %1224 = vmatpush1.bf16.msra.mxu0 %v1207
        %1225 = vmatprep.subr.bf16.mxu0 0
        %1226 = vmatpush1.bf16.msra.mxu0 %v1208
        %1227 = vmatprep.subr.bf16.mxu0 0
        %1228 = vmatpush1.bf16.msra.mxu0 %v1209
        %1229 = vmatprep.subr.bf16.mxu0 0
        %1230 = vmatpush1.bf16.msra.mxu0 %v1210
        %1231 = vmatprep.subr.bf16.mxu0 0
        %1232 = vmatpush1.bf16.msra.mxu0 %v1211
        %1233 = vmatprep.subr.bf16.mxu0 0
        %1234 = vmatpush1.bf16.msra.mxu0 %v1212
        %1235 = vmatprep.subr.bf16.mxu0 0
        %1236 = vmatpush1.bf16.msra.mxu0 %v1213
        %1237 = vmatprep.subr.bf16.mxu0 0
        %1238 = vmatpush1.bf16.msra.mxu0 %v1214
        %1239 = vmatprep.subr.bf16.mxu0 0
        %1240 = vmatpush1.bf16.msra.mxu0 0
        %1241 = vmatprep.subr.bf16.mxu0 0
        %1242 = vmatpush1.bf16.msra.mxu0 0
        %1243 = vmatprep.subr.bf16.mxu0 0
        %1244 = vmatpush1.bf16.msra.mxu0 0
        %1245 = vmatprep.subr.bf16.mxu0 0
        %1246 = vmatpush1.bf16.msra.mxu0 0
        %1247 = vmatprep.subr.bf16.mxu0 0
        %1248 = vmatpush1.bf16.msra.mxu0 0
        %1249 = vmatprep.subr.bf16.mxu0 0
        %1250 = vmatpush1.bf16.msra.mxu0 0
        %1251 = vmatprep.subr.bf16.mxu0 0
        %1252 = vmatpush1.bf16.msra.mxu0 0
        %1253 = vmatprep.subr.bf16.mxu0 0
        %1254 = vmatpush1.bf16.msra.mxu0 0
        %1255 = vmatprep.mubr.bf16.mxu0 0
        %1256 = vmatmul.mubr.bf16.gmra.mrb[0].mxu0 %v1144
        %v1257 = vpop.f32.mrb[0].mxu0
        %v1258 = vadd.f32 %v1173, %v1257
        %v1259 = vpop.f32.mrb[0].mxu0
        %v1260 = vpop.f32.mrb[0].mxu0
        %v1261 = vadd.f32 %v1173, %v1260
        %v1262 = vpop.f32.mrb[0].mxu0
        %1263 = vmatprep.mubr.bf16.mxu0 0
        %1264 = vmatmul.mubr.bf16.gmra.mrb[0].mxu0 %v1145
        %v1265 = vpop.f32.mrb[0].mxu0
        %v1266 = vadd.f32 %v1173, %v1265
        %v1267 = vpop.f32.mrb[0].mxu0
        %v1268 = vpop.f32.mrb[0].mxu0
        %v1269 = vadd.f32 %v1173, %v1268
        %v1270 = vpop.f32.mrb[0].mxu0
        %1271 = vmatprep.mubr.bf16.mxu0 0
        %1272 = vmatmul.mubr.bf16.gmra.mrb[0].mxu0 %v1146
        %v1273 = vpop.f32.mrb[0].mxu0
        %v1274 = vadd.f32 %v1173, %v1273
        %v1275 = vpop.f32.mrb[0].mxu0
        %v1276 = vpop.f32.mrb[0].mxu0
        %v1277 = vadd.f32 %v1173, %v1276
        %v1278 = vpop.f32.mrb[0].mxu0
        %1279 = vmatprep.mubr.bf16.mxu0 0
        %1280 = vmatmul.mubr.bf16.gmra.mrb[0].mxu0 %v1147
        %v1281 = vpop.f32.mrb[0].mxu0
        %v1282 = vadd.f32 %v1173, %v1281
        %v1283 = vpop.f32.mrb[0].mxu0
        %v1284 = vpop.f32.mrb[0].mxu0
        %v1285 = vadd.f32 %v1173, %v1284
        %v1286 = vpop.f32.mrb[0].mxu0
        %1287 = vmatprep.mubr.bf16.mxu0 0
        %1288 = vmatmul.mubr.bf16.gmra.mrb[0].mxu0 %v1148
        %v1289 = vpop.f32.mrb[0].mxu0
        %v1290 = vadd.f32 %v1173, %v1289
        %v1291 = vpop.f32.mrb[0].mxu0
        %v1292 = vpop.f32.mrb[0].mxu0
        %v1293 = vadd.f32 %v1173, %v1292
        %v1294 = vpop.f32.mrb[0].mxu0
        %1295 = vmatprep.mubr.bf16.mxu0 0
        %1296 = vmatmul.mubr.bf16.gmra.mrb[0].mxu0 %v1149
        %v1297 = vpop.f32.mrb[0].mxu0
        %v1298 = vadd.f32 %v1173, %v1297
        %v1299 = vpop.f32.mrb[0].mxu0
        %v1300 = vpop.f32.mrb[0].mxu0
        %v1301 = vadd.f32 %v1173, %v1300
        %v1302 = vpop.f32.mrb[0].mxu0
        %1303 = vmatprep.mubr.bf16.mxu0 0
        %1304 = vmatmul.mubr.bf16.gmra.mrb[0].mxu0 %v1150
        %v1305 = vpop.f32.mrb[0].mxu0
        %v1306 = vadd.f32 %v1173, %v1305
        %v1307 = vpop.f32.mrb[0].mxu0
        %v1308 = vpop.f32.mrb[0].mxu0
        %v1309 = vadd.f32 %v1173, %v1308
        %v1310 = vpop.f32.mrb[0].mxu0
        %1311 = vmatprep.mubr.bf16.mxu0 0
        %1312 = vmatmul.mubr.bf16.gmra.mrb[0].mxu0 %v1151
        %v1313 = vpop.f32.mrb[0].mxu0
        %v1314 = vadd.f32 %v1173, %v1313
        %v1315 = vpop.f32.mrb[0].mxu0
        %v1316 = vpop.f32.mrb[0].mxu0
        %v1317 = vadd.f32 %v1173, %v1316
        %v1318 = vpop.f32.mrb[0].mxu0
        %1319 = vdwg.mxu0
        %v1320 = vmul.f32 %v1258, 0.01
        %v1321 = vmul.f32 %v1261, 0.01
        %v1322 = vmul.f32 %v1266, 0.01
        %v1323 = vmul.f32 %v1269, 0.01
        %v1324 = vmul.f32 %v1274, 0.01
        %v1325 = vmul.f32 %v1277, 0.01
        %v1326 = vmul.f32 %v1282, 0.01
        %v1327 = vmul.f32 %v1285, 0.01
        %v1328 = vmul.f32 %v1290, 0.01
        %v1329 = vmul.f32 %v1293, 0.01
        %v1330 = vmul.f32 %v1298, 0.01
        %v1331 = vmul.f32 %v1301, 0.01
        %v1332 = vmul.f32 %v1306, 0.01
        %v1333 = vmul.f32 %v1309, 0.01
        %v1334 = vmul.f32 %v1314, 0.01
        %v1335 = vmul.f32 %v1317, 0.01
        %v1336 = vmax.f32 %v1258, %v1320
        %v1337 = vmax.f32 %v1261, %v1321
        %v1338 = vmax.f32 %v1266, %v1322
        %v1339 = vmax.f32 %v1269, %v1323
        %v1340 = vmax.f32 %v1274, %v1324
        %v1341 = vmax.f32 %v1277, %v1325
        %v1342 = vmax.f32 %v1282, %v1326
        %v1343 = vmax.f32 %v1285, %v1327
        %v1344 = vmax.f32 %v1290, %v1328
        %v1345 = vmax.f32 %v1293, %v1329
        %v1346 = vmax.f32 %v1298, %v1330
        %v1347 = vmax.f32 %v1301, %v1331
        %v1348 = vmax.f32 %v1306, %v1332
        %v1349 = vmax.f32 %v1309, %v1333
        %v1350 = vmax.f32 %v1314, %v1334
        %v1351 = vmax.f32 %v1317, %v1335
        %v1352 = vpack.c.bf16 %v1337, %v1336
        %v1353 = vpack.c.bf16 %v1339, %v1338
        %v1354 = vpack.c.bf16 %v1341, %v1340
        %v1355 = vpack.c.bf16 %v1343, %v1342
        %v1356 = vpack.c.bf16 %v1345, %v1344
        %v1357 = vpack.c.bf16 %v1347, %v1346
        %v1358 = vpack.c.bf16 %v1349, %v1348
        %v1359 = vpack.c.bf16 %v1351, %v1350
        %v1360 = vld [vmem:[#allocation10] sm:$0xff]
        %v1361 = vld [vmem:[#allocation10 + $0x8] sm:$0xff]
        %v1362 = vld [vmem:[#allocation10 + $0x10] sm:$0xff]
        %v1363 = vld [vmem:[#allocation10 + $0x18] sm:$0xff]
        %v1364 = vld [vmem:[#allocation10 + $0x20] sm:$0xff]
        %v1365 = vld [vmem:[#allocation10 + $0x28] sm:$0xff]
        %v1366 = vld [vmem:[#allocation10 + $0x30] sm:$0xff]
        %v1367 = vld [vmem:[#allocation10 + $0x38] sm:$0xff]
        %v1368 = vld [vmem:[#allocation10 + $0x40] sm:$0xff]
        %v1369 = vld [vmem:[#allocation10 + $0x48] sm:$0xff]
        %v1370 = vld [vmem:[#allocation10 + $0x50] sm:$0xff]
        %v1371 = vld [vmem:[#allocation10 + $0x58] sm:$0xff]
        %v1372 = vld [vmem:[#allocation10 + $0x60] sm:$0xff]
        %v1373 = vld [vmem:[#allocation10 + $0x68] sm:$0xff]
        %v1374 = vld [vmem:[#allocation10 + $0x70] sm:$0xff]
        %v1375 = vld [vmem:[#allocation10 + $0x78] sm:$0xff]
        %v1376 = vld [vmem:[%s9] sm:$0x3]
        %v1378 = vlaneseq
        %v1379 = vshrl.u32 %v1378, 7
        %v1380 = vsub.s32 0, %v1379
        %v1381 = vrot.slane %v1376, %v1380
        %v1382 = vlaneseq
        %v1383 = vshrl.u32 %v1382, 7
        %v1384 = vsub.s32 1, %v1383
        %v1385 = vrot.slane %v1376, %v1384
        %v1404 = vunpack.c.l.b16 %v1360
        %v1405 = vunpack.c.h.b16 %v1360
        %v1406 = vunpack.c.l.b16 %v1361
        %v1407 = vunpack.c.h.b16 %v1361
        %v1408 = vunpack.c.l.b16 %v1362
        %v1409 = vunpack.c.h.b16 %v1362
        %v1410 = vunpack.c.l.b16 %v1363
        %v1411 = vunpack.c.h.b16 %v1363
        %v1412 = vunpack.c.l.b16 %v1364
        %v1413 = vunpack.c.h.b16 %v1364
        %v1414 = vunpack.c.l.b16 %v1365
        %v1415 = vunpack.c.h.b16 %v1365
        %v1416 = vunpack.c.l.b16 %v1366
        %v1417 = vunpack.c.h.b16 %v1366
        %v1418 = vunpack.c.l.b16 %v1367
        %v1419 = vunpack.c.h.b16 %v1367
        %v1420 = vunpack.c.l.b16 %v1368
        %v1421 = vunpack.c.h.b16 %v1368
        %v1422 = vunpack.c.l.b16 %v1369
        %v1423 = vunpack.c.h.b16 %v1369
        %v1424 = vunpack.c.l.b16 %v1370
        %v1425 = vunpack.c.h.b16 %v1370
        %v1426 = vunpack.c.l.b16 %v1371
        %v1427 = vunpack.c.h.b16 %v1371
        %v1428 = vunpack.c.l.b16 %v1372
        %v1429 = vunpack.c.h.b16 %v1372
        %v1430 = vunpack.c.l.b16 %v1373
        %v1431 = vunpack.c.h.b16 %v1373
        %v1432 = vunpack.c.l.b16 %v1374
        %v1433 = vunpack.c.h.b16 %v1374
        %v1434 = vunpack.c.l.b16 %v1375
        %v1435 = vunpack.c.h.b16 %v1375
        %v1436 = vpack.c.b16 %v1406, %v1404
        %v1437 = vpack.c.b16 %v1407, %v1405
        %v1438 = vpack.c.b16 %v1410, %v1408
        %v1439 = vpack.c.b16 %v1411, %v1409
        %v1440 = vpack.c.b16 %v1414, %v1412
        %v1441 = vpack.c.b16 %v1415, %v1413
        %v1442 = vpack.c.b16 %v1418, %v1416
        %v1443 = vpack.c.b16 %v1419, %v1417
        %v1444 = vpack.c.b16 %v1422, %v1420
        %v1445 = vpack.c.b16 %v1423, %v1421
        %v1446 = vpack.c.b16 %v1426, %v1424
        %v1447 = vpack.c.b16 %v1427, %v1425
        %v1448 = vpack.c.b16 %v1430, %v1428
        %v1449 = vpack.c.b16 %v1431, %v1429
        %v1450 = vpack.c.b16 %v1434, %v1432
        %v1451 = vpack.c.b16 %v1435, %v1433
        %1468 = vmatprep.subr.bf16.mxu0 %v1437
        %1469 = vmatpush1.bf16.msra.mxu0 %v1436
        %1470 = vmatprep.subr.bf16.mxu0 %v1439
        %1471 = vmatpush1.bf16.msra.mxu0 %v1438
        %1472 = vmatprep.subr.bf16.mxu0 %v1441
        %1473 = vmatpush1.bf16.msra.mxu0 %v1440
        %1474 = vmatprep.subr.bf16.mxu0 %v1443
        %1475 = vmatpush1.bf16.msra.mxu0 %v1442
        %1476 = vmatprep.subr.bf16.mxu0 %v1445
        %1477 = vmatpush1.bf16.msra.mxu0 %v1444
        %1478 = vmatprep.subr.bf16.mxu0 %v1447
        %1479 = vmatpush1.bf16.msra.mxu0 %v1446
        %1480 = vmatprep.subr.bf16.mxu0 %v1449
        %1481 = vmatpush1.bf16.msra.mxu0 %v1448
        %1482 = vmatprep.subr.bf16.mxu0 %v1451
        %1483 = vmatpush1.bf16.msra.mxu0 %v1450
        %1484 = vmatprep.subr.bf16.mxu0 0
        %1485 = vmatpush1.bf16.msra.mxu0 0
        %1486 = vmatprep.subr.bf16.mxu0 0
        %1487 = vmatpush1.bf16.msra.mxu0 0
        %1488 = vmatprep.subr.bf16.mxu0 0
        %1489 = vmatpush1.bf16.msra.mxu0 0
        %1490 = vmatprep.subr.bf16.mxu0 0
        %1491 = vmatpush1.bf16.msra.mxu0 0
        %1492 = vmatprep.subr.bf16.mxu0 0
        %1493 = vmatpush1.bf16.msra.mxu0 0
        %1494 = vmatprep.subr.bf16.mxu0 0
        %1495 = vmatpush1.bf16.msra.mxu0 0
        %1496 = vmatprep.subr.bf16.mxu0 0
        %1497 = vmatpush1.bf16.msra.mxu0 0
        %1498 = vmatprep.subr.bf16.mxu0 0
        %1499 = vmatpush1.bf16.msra.mxu0 0
        %1500 = vmatprep.mubr.bf16.mxu0 0
        %1501 = vmatmul.mubr.bf16.gmra.mrb[0].mxu0 %v1352
        %v1502 = vpop.f32.mrb[0].mxu0
        %v1503 = vadd.f32 %v1381, %v1502
        %v1504 = vpop.f32.mrb[0].mxu0
        %v1505 = vadd.f32 %v1385, %v1504
        %v1506 = vpop.f32.mrb[0].mxu0
        %v1507 = vadd.f32 %v1381, %v1506
        %v1508 = vpop.f32.mrb[0].mxu0
        %v1509 = vadd.f32 %v1385, %v1508
        %1510 = vmatprep.mubr.bf16.mxu0 0
        %1511 = vmatmul.mubr.bf16.gmra.mrb[0].mxu0 %v1353
        %v1512 = vpop.f32.mrb[0].mxu0
        %v1513 = vadd.f32 %v1381, %v1512
        %v1514 = vpop.f32.mrb[0].mxu0
        %v1515 = vadd.f32 %v1385, %v1514
        %v1516 = vpop.f32.mrb[0].mxu0
        %v1517 = vadd.f32 %v1381, %v1516
        %v1518 = vpop.f32.mrb[0].mxu0
        %v1519 = vadd.f32 %v1385, %v1518
        %1520 = vmatprep.mubr.bf16.mxu0 0
        %1521 = vmatmul.mubr.bf16.gmra.mrb[0].mxu0 %v1354
        %v1522 = vpop.f32.mrb[0].mxu0
        %v1523 = vadd.f32 %v1381, %v1522
        %v1524 = vpop.f32.mrb[0].mxu0
        %v1525 = vadd.f32 %v1385, %v1524
        %v1526 = vpop.f32.mrb[0].mxu0
        %v1527 = vadd.f32 %v1381, %v1526
        %v1528 = vpop.f32.mrb[0].mxu0
        %v1529 = vadd.f32 %v1385, %v1528
        %1530 = vmatprep.mubr.bf16.mxu0 0
        %1531 = vmatmul.mubr.bf16.gmra.mrb[0].mxu0 %v1355
        %v1532 = vpop.f32.mrb[0].mxu0
        %v1533 = vadd.f32 %v1381, %v1532
        %v1534 = vpop.f32.mrb[0].mxu0
        %v1535 = vadd.f32 %v1385, %v1534
        %v1536 = vpop.f32.mrb[0].mxu0
        %v1537 = vadd.f32 %v1381, %v1536
        %v1538 = vpop.f32.mrb[0].mxu0
        %v1539 = vadd.f32 %v1385, %v1538
        %1540 = vmatprep.mubr.bf16.mxu0 0
        %1541 = vmatmul.mubr.bf16.gmra.mrb[0].mxu0 %v1356
        %v1542 = vpop.f32.mrb[0].mxu0
        %v1543 = vadd.f32 %v1381, %v1542
        %v1544 = vpop.f32.mrb[0].mxu0
        %v1545 = vadd.f32 %v1385, %v1544
        %v1546 = vpop.f32.mrb[0].mxu0
        %v1547 = vadd.f32 %v1381, %v1546
        %v1548 = vpop.f32.mrb[0].mxu0
        %v1549 = vadd.f32 %v1385, %v1548
        %1550 = vmatprep.mubr.bf16.mxu0 0
        %1551 = vmatmul.mubr.bf16.gmra.mrb[0].mxu0 %v1357
        %v1552 = vpop.f32.mrb[0].mxu0
        %v1553 = vadd.f32 %v1381, %v1552
        %v1554 = vpop.f32.mrb[0].mxu0
        %v1555 = vadd.f32 %v1385, %v1554
        %v1556 = vpop.f32.mrb[0].mxu0
        %v1557 = vadd.f32 %v1381, %v1556
        %v1558 = vpop.f32.mrb[0].mxu0
        %v1559 = vadd.f32 %v1385, %v1558
        %1560 = vmatprep.mubr.bf16.mxu0 0
        %1561 = vmatmul.mubr.bf16.gmra.mrb[0].mxu0 %v1358
        %v1562 = vpop.f32.mrb[0].mxu0
        %v1563 = vadd.f32 %v1381, %v1562
        %v1564 = vpop.f32.mrb[0].mxu0
        %v1565 = vadd.f32 %v1385, %v1564
        %v1566 = vpop.f32.mrb[0].mxu0
        %v1567 = vadd.f32 %v1381, %v1566
        %v1568 = vpop.f32.mrb[0].mxu0
        %v1569 = vadd.f32 %v1385, %v1568
        %1570 = vmatprep.mubr.bf16.mxu0 0
        %1571 = vmatmul.mubr.bf16.gmra.mrb[0].mxu0 %v1359
        %v1572 = vpop.f32.mrb[0].mxu0
        %v1573 = vadd.f32 %v1381, %v1572
        %v1574 = vpop.f32.mrb[0].mxu0
        %v1575 = vadd.f32 %v1385, %v1574
        %v1576 = vpop.f32.mrb[0].mxu0
        %v1577 = vadd.f32 %v1381, %v1576
        %v1578 = vpop.f32.mrb[0].mxu0
        %v1579 = vadd.f32 %v1385, %v1578
        %1580 = vdwg.mxu0
        %v1581 = vsub.f32 %v539, %v1503
        %v1582 = vsub.f32 %v540, %v1507
        %v1583 = vsub.f32 %v541, %v1513
        %v1584 = vsub.f32 %v542, %v1517
        %v1585 = vsub.f32 %v543, %v1523
        %v1586 = vsub.f32 %v544, %v1527
        %v1587 = vsub.f32 %v545, %v1533
        %v1588 = vsub.f32 %v546, %v1537
        %v1589 = vsub.f32 %v547, %v1543
        %v1590 = vsub.f32 %v548, %v1547
        %v1591 = vsub.f32 %v549, %v1553
        %v1592 = vsub.f32 %v550, %v1557
        %v1593 = vsub.f32 %v551, %v1563
        %v1594 = vsub.f32 %v552, %v1567
        %v1595 = vsub.f32 %v553, %v1573
        %v1596 = vsub.f32 %v554, %v1577
        %v1597 = vmul.f32 %v1581, -0.5
        %v1598 = vmul.f32 %v1582, -0.5
        %v1599 = vmul.f32 %v1583, -0.5
        %v1600 = vmul.f32 %v1584, -0.5
        %v1601 = vmul.f32 %v1585, -0.5
        %v1602 = vmul.f32 %v1586, -0.5
        %v1603 = vmul.f32 %v1587, -0.5
        %v1604 = vmul.f32 %v1588, -0.5
        %v1605 = vmul.f32 %v1589, -0.5
        %v1606 = vmul.f32 %v1590, -0.5
        %v1607 = vmul.f32 %v1591, -0.5
        %v1608 = vmul.f32 %v1592, -0.5
        %v1609 = vmul.f32 %v1593, -0.5
        %v1610 = vmul.f32 %v1594, -0.5
        %v1611 = vmul.f32 %v1595, -0.5
        %v1612 = vmul.f32 %v1596, -0.5
        %v1613 = vmul.f32 %v1597, %v1581
        %v1614 = vmul.f32 %v1598, %v1582
        %v1615 = vmul.f32 %v1599, %v1583
        %v1616 = vmul.f32 %v1600, %v1584
        %v1617 = vmul.f32 %v1601, %v1585
        %v1618 = vmul.f32 %v1602, %v1586
        %v1619 = vmul.f32 %v1603, %v1587
        %v1620 = vmul.f32 %v1604, %v1588
        %v1621 = vmul.f32 %v1605, %v1589
        %v1622 = vmul.f32 %v1606, %v1590
        %v1623 = vmul.f32 %v1607, %v1591
        %v1624 = vmul.f32 %v1608, %v1592
        %v1625 = vmul.f32 %v1609, %v1593
        %v1626 = vmul.f32 %v1610, %v1594
        %v1627 = vmul.f32 %v1611, %v1595
        %v1628 = vmul.f32 %v1612, %v1596
        %v1629 = vsub.f32 0.0, %v1505
        %v1630 = vsub.f32 0.0, %v1509
        %v1631 = vsub.f32 0.0, %v1515
        %v1632 = vsub.f32 0.0, %v1519
        %v1633 = vsub.f32 0.0, %v1525
        %v1634 = vsub.f32 0.0, %v1529
        %v1635 = vsub.f32 0.0, %v1535
        %v1636 = vsub.f32 0.0, %v1539
        %v1637 = vsub.f32 0.0, %v1545
        %v1638 = vsub.f32 0.0, %v1549
        %v1639 = vsub.f32 0.0, %v1555
        %v1640 = vsub.f32 0.0, %v1559
        %v1641 = vsub.f32 0.0, %v1565
        %v1642 = vsub.f32 0.0, %v1569
        %v1643 = vsub.f32 0.0, %v1575
        %v1644 = vsub.f32 0.0, %v1579
        %v1645 = vmul.f32 %v1629, 1.442695
        %v1646 = vpow.pop %v1645
        %v1647 = vmul.f32 %v1630, 1.442695
        %v1648 = vpow.pop %v1647
        %v1649 = vmul.f32 %v1631, 1.442695
        %v1650 = vpow.pop %v1649
        %v1651 = vmul.f32 %v1632, 1.442695
        %v1652 = vpow.pop %v1651
        %v1653 = vmul.f32 %v1633, 1.442695
        %v1654 = vpow.pop %v1653
        %v1655 = vmul.f32 %v1634, 1.442695
        %v1656 = vpow.pop %v1655
        %v1657 = vmul.f32 %v1635, 1.442695
        %v1658 = vpow.pop %v1657
        %v1659 = vmul.f32 %v1636, 1.442695
        %v1660 = vpow.pop %v1659
        %v1661 = vmul.f32 %v1637, 1.442695
        %v1662 = vpow.pop %v1661
        %v1663 = vmul.f32 %v1638, 1.442695
        %v1664 = vpow.pop %v1663
        %v1665 = vmul.f32 %v1639, 1.442695
        %v1666 = vpow.pop %v1665
        %v1667 = vmul.f32 %v1640, 1.442695
        %v1668 = vpow.pop %v1667
        %v1669 = vmul.f32 %v1641, 1.442695
        %v1670 = vpow.pop %v1669
        %v1671 = vmul.f32 %v1642, 1.442695
        %v1672 = vpow.pop %v1671
        %v1673 = vmul.f32 %v1643, 1.442695
        %v1674 = vpow.pop %v1673
        %v1675 = vmul.f32 %v1644, 1.442695
        %v1676 = vpow.pop %v1675
        %v1677 = vmul.f32 %v1613, %v1646
        %v1678 = vmul.f32 %v1614, %v1648
        %v1679 = vmul.f32 %v1615, %v1650
        %v1680 = vmul.f32 %v1616, %v1652
        %v1681 = vmul.f32 %v1617, %v1654
        %v1682 = vmul.f32 %v1618, %v1656
        %v1683 = vmul.f32 %v1619, %v1658
        %v1684 = vmul.f32 %v1620, %v1660
        %v1685 = vmul.f32 %v1621, %v1662
        %v1686 = vmul.f32 %v1622, %v1664
        %v1687 = vmul.f32 %v1623, %v1666
        %v1688 = vmul.f32 %v1624, %v1668
        %v1689 = vmul.f32 %v1625, %v1670
        %v1690 = vmul.f32 %v1626, %v1672
        %v1691 = vmul.f32 %v1627, %v1674
        %v1692 = vmul.f32 %v1628, %v1676
        %v1693 = vmul.f32 %v1505, 0.5
        %v1694 = vmul.f32 %v1509, 0.5
        %v1695 = vmul.f32 %v1515, 0.5
        %v1696 = vmul.f32 %v1519, 0.5
        %v1697 = vmul.f32 %v1525, 0.5
        %v1698 = vmul.f32 %v1529, 0.5
        %v1699 = vmul.f32 %v1535, 0.5
        %v1700 = vmul.f32 %v1539, 0.5
        %v1701 = vmul.f32 %v1545, 0.5
        %v1702 = vmul.f32 %v1549, 0.5
        %v1703 = vmul.f32 %v1555, 0.5
        %v1704 = vmul.f32 %v1559, 0.5
        %v1705 = vmul.f32 %v1565, 0.5
        %v1706 = vmul.f32 %v1569, 0.5
        %v1707 = vmul.f32 %v1575, 0.5
        %v1708 = vmul.f32 %v1579, 0.5
        %v1709 = vsub.f32 %v1677, %v1693
        %v1710 = vsub.f32 %v1678, %v1694
        %v1711 = vsub.f32 %v1679, %v1695
        %v1712 = vsub.f32 %v1680, %v1696
        %v1713 = vsub.f32 %v1681, %v1697
        %v1714 = vsub.f32 %v1682, %v1698
        %v1715 = vsub.f32 %v1683, %v1699
        %v1716 = vsub.f32 %v1684, %v1700
        %v1717 = vsub.f32 %v1685, %v1701
        %v1718 = vsub.f32 %v1686, %v1702
        %v1719 = vsub.f32 %v1687, %v1703
        %v1720 = vsub.f32 %v1688, %v1704
        %v1721 = vsub.f32 %v1689, %v1705
        %v1722 = vsub.f32 %v1690, %v1706
        %v1723 = vsub.f32 %v1691, %v1707
        %v1724 = vsub.f32 %v1692, %v1708
        %v1725 = vsub.f32 %v1709, 0.9189385
        %v1726 = vsub.f32 %v1710, 0.9189385
        %v1727 = vsub.f32 %v1711, 0.9189385
        %v1728 = vsub.f32 %v1712, 0.9189385
        %v1729 = vsub.f32 %v1713, 0.9189385
        %v1730 = vsub.f32 %v1714, 0.9189385
        %v1731 = vsub.f32 %v1715, 0.9189385
        %v1732 = vsub.f32 %v1716, 0.9189385
        %v1733 = vsub.f32 %v1717, 0.9189385
        %v1734 = vsub.f32 %v1718, 0.9189385
        %v1735 = vsub.f32 %v1719, 0.9189385
        %v1736 = vsub.f32 %v1720, 0.9189385
        %v1737 = vsub.f32 %v1721, 0.9189385
        %v1738 = vsub.f32 %v1722, 0.9189385
        %v1739 = vsub.f32 %v1723, 0.9189385
        %v1740 = vsub.f32 %v1724, 0.9189385
        %v1741 = vlaneseq
        %v1742 = vand.u32 %v1741, 127
        %vm1743 = vcmp.lt.s32.totalorder %v1742, 16
        %v1744 = vsel %vm1743, 1, 0
        %vm1745 = vcmp.eq.s32.totalorder %v1744, 1
        %v1746 = vsel %vm1745, %v1725, 0.0
        %v1747 = vsel %vm1745, %v1726, 0.0
        %v1748 = vsel %vm1745, %v1727, 0.0
        %v1749 = vsel %vm1745, %v1728, 0.0
        %v1750 = vsel %vm1745, %v1729, 0.0
        %v1751 = vsel %vm1745, %v1730, 0.0
        %v1752 = vsel %vm1745, %v1731, 0.0
        %v1753 = vsel %vm1745, %v1732, 0.0
        %v1754 = vsel %vm1745, %v1733, 0.0
        %v1755 = vsel %vm1745, %v1734, 0.0
        %v1756 = vsel %vm1745, %v1735, 0.0
        %v1757 = vsel %vm1745, %v1736, 0.0
        %v1758 = vsel %vm1745, %v1737, 0.0
        %v1759 = vsel %vm1745, %v1738, 0.0
        %v1760 = vsel %vm1745, %v1739, 0.0
        %v1761 = vsel %vm1745, %v1740, 0.0
        %1762 = vadd.xlane.f32.xlu0 %v1746
        %v1763 = vpop.xlane.xlu0 %1762
        %1764 = vadd.xlane.f32.xlu0 %v1747
        %v1765 = vpop.xlane.xlu0 %1764
        %1766 = vadd.xlane.f32.xlu0 %v1748
        %v1767 = vpop.xlane.xlu0 %1766
        %1768 = vadd.xlane.f32.xlu0 %v1749
        %v1769 = vpop.xlane.xlu0 %1768
        %1770 = vadd.xlane.f32.xlu0 %v1750
        %v1771 = vpop.xlane.xlu0 %1770
        %1772 = vadd.xlane.f32.xlu0 %v1751
        %v1773 = vpop.xlane.xlu0 %1772
        %1774 = vadd.xlane.f32.xlu0 %v1752
        %v1775 = vpop.xlane.xlu0 %1774
        %1776 = vadd.xlane.f32.xlu0 %v1753
        %v1777 = vpop.xlane.xlu0 %1776
        %1778 = vadd.xlane.f32.xlu0 %v1754
        %v1779 = vpop.xlane.xlu0 %1778
        %1780 = vadd.xlane.f32.xlu0 %v1755
        %v1781 = vpop.xlane.xlu0 %1780
        %1782 = vadd.xlane.f32.xlu0 %v1756
        %v1783 = vpop.xlane.xlu0 %1782
        %1784 = vadd.xlane.f32.xlu0 %v1757
        %v1785 = vpop.xlane.xlu0 %1784
        %1786 = vadd.xlane.f32.xlu0 %v1758
        %v1787 = vpop.xlane.xlu0 %1786
        %1788 = vadd.xlane.f32.xlu0 %v1759
        %v1789 = vpop.xlane.xlu0 %1788
        %1790 = vadd.xlane.f32.xlu0 %v1760
        %v1791 = vpop.xlane.xlu0 %1790
        %1792 = vadd.xlane.f32.xlu0 %v1761
        %v1793 = vpop.xlane.xlu0 %1792
        %v1794 = vsub.f32 0.0, %v1763
        %v1795 = vsub.f32 0.0, %v1765
        %v1796 = vsub.f32 0.0, %v1767
        %v1797 = vsub.f32 0.0, %v1769
        %v1798 = vsub.f32 0.0, %v1771
        %v1799 = vsub.f32 0.0, %v1773
        %v1800 = vsub.f32 0.0, %v1775
        %v1801 = vsub.f32 0.0, %v1777
        %v1802 = vsub.f32 0.0, %v1779
        %v1803 = vsub.f32 0.0, %v1781
        %v1804 = vsub.f32 0.0, %v1783
        %v1805 = vsub.f32 0.0, %v1785
        %v1806 = vsub.f32 0.0, %v1787
        %v1807 = vsub.f32 0.0, %v1789
        %v1808 = vsub.f32 0.0, %v1791
        %v1809 = vsub.f32 0.0, %v1793
        %vm1810 = vcmp.lt.s32.totalorder %v1742, 8
        %v1811 = vsub.f32 %v1049, 1.0
        %v1812 = vsub.f32 %v1051, 1.0
        %v1813 = vsub.f32 %v1053, 1.0
        %v1814 = vsub.f32 %v1055, 1.0
        %v1815 = vsub.f32 %v1057, 1.0
        %v1816 = vsub.f32 %v1059, 1.0
        %v1817 = vsub.f32 %v1061, 1.0
        %v1818 = vsub.f32 %v1063, 1.0
        %v1819 = vsub.f32 %v1065, 1.0
        %v1820 = vsub.f32 %v1067, 1.0
        %v1821 = vsub.f32 %v1069, 1.0
        %v1822 = vsub.f32 %v1071, 1.0
        %v1823 = vsub.f32 %v1073, 1.0
        %v1824 = vsub.f32 %v1075, 1.0
        %v1825 = vsub.f32 %v1077, 1.0
        %v1826 = vsub.f32 %v1079, 1.0
        %v1827 = vadd.f32 %v1049, 1e-08
        %v1828 = vadd.f32 %v1051, 1e-08
        %v1829 = vadd.f32 %v1053, 1e-08
        %v1830 = vadd.f32 %v1055, 1e-08
        %v1831 = vadd.f32 %v1057, 1e-08
        %v1832 = vadd.f32 %v1059, 1e-08
        %v1833 = vadd.f32 %v1061, 1e-08
        %v1834 = vadd.f32 %v1063, 1e-08
        %v1835 = vadd.f32 %v1065, 1e-08
        %v1836 = vadd.f32 %v1067, 1e-08
        %v1837 = vadd.f32 %v1069, 1e-08
        %v1838 = vadd.f32 %v1071, 1e-08
        %v1839 = vadd.f32 %v1073, 1e-08
        %v1840 = vadd.f32 %v1075, 1e-08
        %v1841 = vadd.f32 %v1077, 1e-08
        %v1842 = vadd.f32 %v1079, 1e-08
        %v1843 = vlog2.pop %v1827
        %v1844 = vmul.f32 %v1843, 0.6931472
        %v1845 = vlog2.pop %v1828
        %v1846 = vmul.f32 %v1845, 0.6931472
        %v1847 = vlog2.pop %v1829
        %v1848 = vmul.f32 %v1847, 0.6931472
        %v1849 = vlog2.pop %v1830
        %v1850 = vmul.f32 %v1849, 0.6931472
        %v1851 = vlog2.pop %v1831
        %v1852 = vmul.f32 %v1851, 0.6931472
        %v1853 = vlog2.pop %v1832
        %v1854 = vmul.f32 %v1853, 0.6931472
        %v1855 = vlog2.pop %v1833
        %v1856 = vmul.f32 %v1855, 0.6931472
        %v1857 = vlog2.pop %v1834
        %v1858 = vmul.f32 %v1857, 0.6931472
        %v1859 = vlog2.pop %v1835
        %v1860 = vmul.f32 %v1859, 0.6931472
        %v1861 = vlog2.pop %v1836
        %v1862 = vmul.f32 %v1861, 0.6931472
        %v1863 = vlog2.pop %v1837
        %v1864 = vmul.f32 %v1863, 0.6931472
        %v1865 = vlog2.pop %v1838
        %v1866 = vmul.f32 %v1865, 0.6931472
        %v1867 = vlog2.pop %v1839
        %v1868 = vmul.f32 %v1867, 0.6931472
        %v1869 = vlog2.pop %v1840
        %v1870 = vmul.f32 %v1869, 0.6931472
        %v1871 = vlog2.pop %v1841
        %v1872 = vmul.f32 %v1871, 0.6931472
        %v1873 = vlog2.pop %v1842
        %v1874 = vmul.f32 %v1873, 0.6931472
        %v1875 = vsub.f32 %v1811, %v1844
        %v1876 = vsub.f32 %v1812, %v1846
        %v1877 = vsub.f32 %v1813, %v1848
        %v1878 = vsub.f32 %v1814, %v1850
        %v1879 = vsub.f32 %v1815, %v1852
        %v1880 = vsub.f32 %v1816, %v1854
        %v1881 = vsub.f32 %v1817, %v1856
        %v1882 = vsub.f32 %v1818, %v1858
        %v1883 = vsub.f32 %v1819, %v1860
        %v1884 = vsub.f32 %v1820, %v1862
        %v1885 = vsub.f32 %v1821, %v1864
        %v1886 = vsub.f32 %v1822, %v1866
        %v1887 = vsub.f32 %v1823, %v1868
        %v1888 = vsub.f32 %v1824, %v1870
        %v1889 = vsub.f32 %v1825, %v1872
        %v1890 = vsub.f32 %v1826, %v1874
        %v1891 = vmul.f32 %v954, %v954
        %v1892 = vmul.f32 %v958, %v958
        %v1893 = vmul.f32 %v964, %v964
        %v1894 = vmul.f32 %v968, %v968
        %v1895 = vmul.f32 %v974, %v974
        %v1896 = vmul.f32 %v978, %v978
        %v1897 = vmul.f32 %v984, %v984
        %v1898 = vmul.f32 %v988, %v988
        %v1899 = vmul.f32 %v994, %v994
        %v1900 = vmul.f32 %v998, %v998
        %v1901 = vmul.f32 %v1004, %v1004
        %v1902 = vmul.f32 %v1008, %v1008
        %v1903 = vmul.f32 %v1014, %v1014
        %v1904 = vmul.f32 %v1018, %v1018
        %v1905 = vmul.f32 %v1024, %v1024
        %v1906 = vmul.f32 %v1028, %v1028
        %v1907 = vadd.f32 %v1875, %v1891
        %v1908 = vadd.f32 %v1876, %v1892
        %v1909 = vadd.f32 %v1877, %v1893
        %v1910 = vadd.f32 %v1878, %v1894
        %v1911 = vadd.f32 %v1879, %v1895
        %v1912 = vadd.f32 %v1880, %v1896
        %v1913 = vadd.f32 %v1881, %v1897
        %v1914 = vadd.f32 %v1882, %v1898
        %v1915 = vadd.f32 %v1883, %v1899
        %v1916 = vadd.f32 %v1884, %v1900
        %v1917 = vadd.f32 %v1885, %v1901
        %v1918 = vadd.f32 %v1886, %v1902
        %v1919 = vadd.f32 %v1887, %v1903
        %v1920 = vadd.f32 %v1888, %v1904
        %v1921 = vadd.f32 %v1889, %v1905
        %v1922 = vadd.f32 %v1890, %v1906
        %v1923 = vsel %vm1810, 1, 0
        %vm1924 = vcmp.eq.s32.totalorder %v1923, 1
        %v1925 = vsel %vm1924, %v1907, 0.0
        %v1926 = vsel %vm1924, %v1908, 0.0
        %v1927 = vsel %vm1924, %v1909, 0.0
        %v1928 = vsel %vm1924, %v1910, 0.0
        %v1929 = vsel %vm1924, %v1911, 0.0
        %v1930 = vsel %vm1924, %v1912, 0.0
        %v1931 = vsel %vm1924, %v1913, 0.0
        %v1932 = vsel %vm1924, %v1914, 0.0
        %v1933 = vsel %vm1924, %v1915, 0.0
        %v1934 = vsel %vm1924, %v1916, 0.0
        %v1935 = vsel %vm1924, %v1917, 0.0
        %v1936 = vsel %vm1924, %v1918, 0.0
        %v1937 = vsel %vm1924, %v1919, 0.0
        %v1938 = vsel %vm1924, %v1920, 0.0
        %v1939 = vsel %vm1924, %v1921, 0.0
        %v1940 = vsel %vm1924, %v1922, 0.0
        %1941 = vadd.xlane.f32.xlu0 %v1925
        %v1942 = vpop.xlane.xlu0 %1941
        %1943 = vadd.xlane.f32.xlu0 %v1926
        %v1944 = vpop.xlane.xlu0 %1943
        %1945 = vadd.xlane.f32.xlu0 %v1927
        %v1946 = vpop.xlane.xlu0 %1945
        %1947 = vadd.xlane.f32.xlu0 %v1928
        %v1948 = vpop.xlane.xlu0 %1947
        %1949 = vadd.xlane.f32.xlu0 %v1929
        %v1950 = vpop.xlane.xlu0 %1949
        %1951 = vadd.xlane.f32.xlu0 %v1930
        %v1952 = vpop.xlane.xlu0 %1951
        %1953 = vadd.xlane.f32.xlu0 %v1931
        %v1954 = vpop.xlane.xlu0 %1953
        %1955 = vadd.xlane.f32.xlu0 %v1932
        %v1956 = vpop.xlane.xlu0 %1955
        %1957 = vadd.xlane.f32.xlu0 %v1933
        %v1958 = vpop.xlane.xlu0 %1957
        %1959 = vadd.xlane.f32.xlu0 %v1934
        %v1960 = vpop.xlane.xlu0 %1959
        %1961 = vadd.xlane.f32.xlu0 %v1935
        %v1962 = vpop.xlane.xlu0 %1961
        %1963 = vadd.xlane.f32.xlu0 %v1936
        %v1964 = vpop.xlane.xlu0 %1963
        %1965 = vadd.xlane.f32.xlu0 %v1937
        %v1966 = vpop.xlane.xlu0 %1965
        %1967 = vadd.xlane.f32.xlu0 %v1938
        %v1968 = vpop.xlane.xlu0 %1967
        %1969 = vadd.xlane.f32.xlu0 %v1939
        %v1970 = vpop.xlane.xlu0 %1969
        %1971 = vadd.xlane.f32.xlu0 %v1940
        %v1972 = vpop.xlane.xlu0 %1971
        %v1973 = vmul.f32 %v1942, 0.5
        %v1974 = vmul.f32 %v1944, 0.5
        %v1975 = vmul.f32 %v1946, 0.5
        %v1976 = vmul.f32 %v1948, 0.5
        %v1977 = vmul.f32 %v1950, 0.5
        %v1978 = vmul.f32 %v1952, 0.5
        %v1979 = vmul.f32 %v1954, 0.5
        %v1980 = vmul.f32 %v1956, 0.5
        %v1981 = vmul.f32 %v1958, 0.5
        %v1982 = vmul.f32 %v1960, 0.5
        %v1983 = vmul.f32 %v1962, 0.5
        %v1984 = vmul.f32 %v1964, 0.5
        %v1985 = vmul.f32 %v1966, 0.5
        %v1986 = vmul.f32 %v1968, 0.5
        %v1987 = vmul.f32 %v1970, 0.5
        %v1988 = vmul.f32 %v1972, 0.5
        %vm1989 = vcmask 7168
        %1990 = vst.msk [vmem:[%s514] sm:$0xff] %vm1989, %v1794
        %1991 = vst.msk [vmem:[%s514 + $0x8] sm:$0xff] %vm1989, %v1795
        %1992 = vst.msk [vmem:[%s514 + $0x10] sm:$0xff] %vm1989, %v1796
        %1993 = vst.msk [vmem:[%s514 + $0x18] sm:$0xff] %vm1989, %v1797
        %1994 = vst.msk [vmem:[%s514 + $0x20] sm:$0xff] %vm1989, %v1798
        %1995 = vst.msk [vmem:[%s514 + $0x28] sm:$0xff] %vm1989, %v1799
        %1996 = vst.msk [vmem:[%s514 + $0x30] sm:$0xff] %vm1989, %v1800
        %1997 = vst.msk [vmem:[%s514 + $0x38] sm:$0xff] %vm1989, %v1801
        %1998 = vst.msk [vmem:[%s514 + $0x40] sm:$0xff] %vm1989, %v1802
        %1999 = vst.msk [vmem:[%s514 + $0x48] sm:$0xff] %vm1989, %v1803
        %2000 = vst.msk [vmem:[%s514 + $0x50] sm:$0xff] %vm1989, %v1804
        %2001 = vst.msk [vmem:[%s514 + $0x58] sm:$0xff] %vm1989, %v1805
        %2002 = vst.msk [vmem:[%s514 + $0x60] sm:$0xff] %vm1989, %v1806
        %2003 = vst.msk [vmem:[%s514 + $0x68] sm:$0xff] %vm1989, %v1807
        %2004 = vst.msk [vmem:[%s514 + $0x70] sm:$0xff] %vm1989, %v1808
        %2005 = vst.msk [vmem:[%s514 + $0x78] sm:$0xff] %vm1989, %v1809
        %2006 = vst.msk [vmem:[%s520] sm:$0xff] %vm1989, %v1973
        %2007 = vst.msk [vmem:[%s520 + $0x8] sm:$0xff] %vm1989, %v1974
        %2008 = vst.msk [vmem:[%s520 + $0x10] sm:$0xff] %vm1989, %v1975
        %2009 = vst.msk [vmem:[%s520 + $0x18] sm:$0xff] %vm1989, %v1976
        %2010 = vst.msk [vmem:[%s520 + $0x20] sm:$0xff] %vm1989, %v1977
        %2011 = vst.msk [vmem:[%s520 + $0x28] sm:$0xff] %vm1989, %v1978
        %2012 = vst.msk [vmem:[%s520 + $0x30] sm:$0xff] %vm1989, %v1979
        %2013 = vst.msk [vmem:[%s520 + $0x38] sm:$0xff] %vm1989, %v1980
        %2014 = vst.msk [vmem:[%s520 + $0x40] sm:$0xff] %vm1989, %v1981
        %2015 = vst.msk [vmem:[%s520 + $0x48] sm:$0xff] %vm1989, %v1982
        %2016 = vst.msk [vmem:[%s520 + $0x50] sm:$0xff] %vm1989, %v1983
        %2017 = vst.msk [vmem:[%s520 + $0x58] sm:$0xff] %vm1989, %v1984
        %2018 = vst.msk [vmem:[%s520 + $0x60] sm:$0xff] %vm1989, %v1985
        %2019 = vst.msk [vmem:[%s520 + $0x68] sm:$0xff] %vm1989, %v1986
        %2020 = vst.msk [vmem:[%s520 + $0x70] sm:$0xff] %vm1989, %v1987
        %2021 = vst.msk [vmem:[%s520 + $0x78] sm:$0xff] %vm1989, %v1988
        %s2022 = smul.u32 16, %s31
        %p2023 = scmp.lt.s32.totalorder %s2022, 31
        %s2024 = scalar_select %p2023, %s2022, 31
        %s2025 = smul.addr %s2024, 8
        %s2026 = scalar_lea.vmem %s10, %s2025
        %s2027 = smul.u32 16, %s31
        %p2028 = scmp.lt.s32.totalorder %s2027, 31
        %s2029 = scalar_select %p2028, %s2027, 31
        %s2030 = smul.addr %s2029, 8
        %s2031 = scalar_lea.vmem %s11, %s2030
        // Predicated region
        $region85: #{tpu_custom_call.1} parent=59 // pred_check
          %p2032 = pneg %p269
        $region86: #{tpu_custom_call.1} parent=59 // pred_check_branch
          %2034 = sbr.rel (%p2032) target = $region88
        $region87: #{tpu_custom_call.1} parent=59 // pred_region
          %s2035 = smul.u32 16, %s31
        $region88: #{tpu_custom_call.1} parent=59 // pred_fallthru
          _
        // Predicated region
        $region89: #{tpu_custom_call.1} parent=59 // pred_check
          %p2036 = pneg %p295
        $region90: #{tpu_custom_call.1} parent=59 // pred_check_branch
          %2038 = sbr.rel (%p2036) target = $region92
        $region91: #{tpu_custom_call.1} parent=59 // pred_region
          %s2039 = smul.u32 16, %s31
        $region92: #{tpu_custom_call.1} parent=59 // pred_fallthru
          _
      $region60: #{tpu_custom_call.1} parent=5 // pred_fallthru
        _
      %p2040 = scmp.le.s32.totalorder 2, %s26
      // Predicated region
      $region93: #{tpu_custom_call.1} parent=5 // pred_check
        %p2041 = pneg %p2040
      $region94: #{tpu_custom_call.1} parent=5 // pred_check_branch
        %2043 = sbr.rel (%p2041) target = $region96
      $region95: #{tpu_custom_call.1} parent=5 // pred_region
        %s2044 = ssub.s32 %s26, 2
        // Predicated region
        $region97: #{tpu_custom_call.1} parent=95 // pred_check
          %p2045 = pneg %p275
        $region98: #{tpu_custom_call.1} parent=95 // pred_check_branch
          %2047 = sbr.rel (%p2045) target = $region100
        $region99: #{tpu_custom_call.1} parent=95 // pred_region
          %s2048 = smul.u32 16, %s32
          %p2049 = scmp.lt.s32.totalorder %s2048, 31
          %s2050 = scalar_select %p2049, %s2048, 31
          %s2051 = smul.addr %s2050, 8
          %s2052 = scalar_lea.vmem %s10, %s2051
        $region100: #{tpu_custom_call.1} parent=95 // pred_fallthru
          _
        // Predicated region
        $region101: #{tpu_custom_call.1} parent=95 // pred_check
          %p2053 = pneg %p301
        $region102: #{tpu_custom_call.1} parent=95 // pred_check_branch
          %2055 = sbr.rel (%p2053) target = $region104
        $region103: #{tpu_custom_call.1} parent=95 // pred_region
          %s2056 = smul.u32 16, %s32
          %p2057 = scmp.lt.s32.totalorder %s2056, 31
          %s2058 = scalar_select %p2057, %s2056, 31
          %s2059 = smul.addr %s2058, 8
          %s2060 = scalar_lea.vmem %s11, %s2059
        $region104: #{tpu_custom_call.1} parent=95 // pred_fallthru
          _
      $region96: #{tpu_custom_call.1} parent=5 // pred_fallthru
        _
    $region6: #{tpu_custom_call.1} parent=1 // loop_footer
      %s30 = sadd.s32 1, %s26
    $region7: #{tpu_custom_call.1} parent=1 // loop_footer_branch
      %25 = sbr.rel target = $region3
    $region8: #{tpu_custom_call.1} parent=1 // loop_exit
      _
    %2061 = vsyncpa [#allocation3], 1
    %s2062 = scalar_lea.sflag [#allocation3], 1
    %2063 = vsyncpa %s2062, 1
    %2064 = vsyncpa [#allocation5], 1
    %s2065 = scalar_lea.sflag [#allocation5], 1
    %2066 = vsyncpa %s2065, 1
    %2067 = vsyncpa [#allocation8], 1
    %2068 = vsyncpa [#allocation11], 1

</llo_original>
